<compile_context>
chip_gen: v7x
topology: tpu7x:2x2x1
jax: 0.10.0
libtpu: 0.0.40
codegen_flags: <defaults>
</compile_context>

<pallas_src>
import functools

import jax
import jax.numpy as jnp
from jax.experimental import pallas as pl
from jax.experimental.pallas import tpu as pltpu


def _gru_kernel(x_ref, wi_ref, wh_ref, bias_ref, wp_ref, wfb_ref,
                out_ref, gates_ref, *, seq_len, hidden):
    T = seq_len
    H = hidden
    TB = x_ref.shape[0]            # x is time-major, flattened: (T*Bp, I)
    Bp = TB // T                   # batch padded to a sublane multiple (8)

    # ---- unpack the small packed operands (one-time, trivial lane slices) ----
    bi = bias_ref[0:1, :]          # (1, 3H) fused biases: [b_ir+b_hr | b_iz+b_hz | b_in]
    bhn = bias_ref[1:2, :H]        # (1, H)  b_hn stays inside r * (W_hn h + b_hn)
    ln_g = bias_ref[2:3, :H]
    ln_b = bias_ref[3:4, :H]
    bp = bias_ref[4:5, :H]

    # ---- hoisted fused input projection: ONE MXU matmul for all timesteps ----
    # Staged in VMEM scratch so the unrolled loop doesn't keep it live in vregs.
    gates_ref[...] = (
        jnp.dot(x_ref[...], wi_ref[...], preferred_element_type=jnp.float32) + bi
    )

    wh = wh_ref[...]                                   # (H, 3H) fused hidden weight
    bhn_b = jnp.broadcast_to(bhn, (Bp, H))             # broadcast hoisted out of loop

    # ---- recurrence: T is small & static -> fully unrolled straight-line code.
    # One (Bp,3H) vld + ONE (Bp,H)x(H,3H) MXU matmul + VPU/EUP gate math per step.
    h = jnp.zeros((Bp, H), jnp.float32)
    for t in range(T):
        gi = gates_ref[pl.ds(t * Bp, Bp), :]           # (Bp, 3H) staged gate slice
        gh = jnp.dot(h, wh, preferred_element_type=jnp.float32)   # (Bp, 3H)
        rz = jax.nn.sigmoid(gi[:, :2 * H] + gh[:, :2 * H])        # fused [r|z] sigmoid
        r = rz[:, :H]
        z = rz[:, H:]
        n = jnp.tanh(gi[:, 2 * H:] + r * (gh[:, 2 * H:] + bhn_b))
        h = (1.0 - z) * n + z * h

    # ---- fused head: LayerNorm -> ReLU -> Linear (+ residual) -> FC -> sigmoid.
    mu = jnp.mean(h, axis=-1, keepdims=True)
    var = jnp.mean((h - mu) ** 2, axis=-1, keepdims=True)
    y = (h - mu) * jax.lax.rsqrt(var + 1e-5)
    y = y * ln_g + ln_b
    y = jnp.maximum(y, 0.0)
    y = jnp.dot(y, wp_ref[...], preferred_element_type=jnp.float32) + bp
    hr = h + y                                         # residual 'booster'
    # dropout: identity in eval mode
    wf = wfb_ref[:H, :]                                # (H, Op)
    bf = wfb_ref[H:H + 1, :]                           # (1, Op)
    o = jnp.dot(hr, wf, preferred_element_type=jnp.float32) + bf
    out_ref[...] = jax.nn.sigmoid(o)


def _round_up(n, m):
    return ((n + m - 1) // m) * m


def prepare_params(params):
    """One-time layout prep: gate fusion, bias folding, transposes, packing.

    Keeps per-call work down to x transpose/pad/reshape + the pallas_call.
    """
    H = params["w_hh"].shape[1]
    O = params["w_fc"].shape[0]
    Op = _round_up(max(O, 128), 128)    # lane-dense output (sliced back per call)

    w_ih, w_hh = params["w_ih"], params["w_hh"]        # (3H, I), (3H, H), rows [r|z|n]
    b_ih, b_hh = params["b_ih"], params["b_hh"]        # (3H,), (3H,)

    # Fused per-gate weights, pre-transposed to (in_dim, 3H); columns [r|z|n].
    wi = jnp.asarray(w_ih.T, jnp.float32)              # (I, 3H)
    wh = jnp.asarray(w_hh.T, jnp.float32)              # (H, 3H)

    # Fold input+hidden biases for r/z; keep b_in alone for n; b_hn separate.
    bi = jnp.concatenate([b_ih[:2 * H] + b_hh[:2 * H], b_ih[2 * H:]])   # (3H,)
    bhn = b_hh[2 * H:]                                                  # (H,)

    def _row(v):
        return jnp.pad(jnp.asarray(v, jnp.float32), (0, 3 * H - v.shape[0]))

    zero = jnp.zeros((3 * H,), jnp.float32)
    bias_pack = jnp.stack([                              # (8, 3H), full sublanes
        _row(bi), _row(bhn),
        _row(params["ln_g"]), _row(params["ln_b"]), _row(params["b_post"]),
        zero, zero, zero,
    ])

    wp = jnp.asarray(params["w_post"].T, jnp.float32)    # (H, H)
    wf = jnp.pad(jnp.asarray(params["w_fc"].T, jnp.float32), ((0, 0), (0, Op - O)))
    bf = jnp.pad(jnp.asarray(params["b_fc"], jnp.float32).reshape(1, O),
                 ((0, 0), (0, Op - O)))
    wfb = jnp.concatenate([wf, bf], axis=0)              # (H+1, Op)

    return {"wi": wi, "wh": wh, "bias": bias_pack, "wp": wp, "wfb": wfb,
            "out_size": O}


@functools.partial(jax.jit, static_argnames=("out_size",))
def _forward(x, wi, wh, bias_pack, wp, wfb, *, out_size):
    B, T, I = x.shape
    H = wh.shape[0]
    Op = wfb.shape[1]
    Bp = _round_up(max(B, 8), 8)         # pad batch to full sublanes

    # time-major, batch-padded, flattened input: (T*Bp, I)
    x_tm = jnp.transpose(x.astype(jnp.float32), (1, 0, 2))
    x_tm = jnp.pad(x_tm, ((0, 0), (0, Bp - B), (0, 0))).reshape(T * Bp, I)

    vmem = pl.BlockSpec(memory_space=pltpu.MemorySpace.VMEM)
    kernel = functools.partial(_gru_kernel, seq_len=T, hidden=H)

    out = pl.pallas_call(
        kernel,
        out_shape=jax.ShapeDtypeStruct((Bp, Op), jnp.float32),
        in_specs=[vmem] * 6,
        out_specs=vmem,
        scratch_shapes=[pltpu.VMEM((T * Bp, 3 * H), jnp.float32)],
    )(x_tm, wi, wh, bias_pack, wp, wfb)

    return out[:B, :out_size]


def gru_anomaly_detector(x, prepared):
    """x: (B, T, I) or (B, I) float32 (batch_first, like PyTorch). Returns (B, O)."""
    if x.ndim == 2:                      # mirrors the module's unsqueeze(1)
        x = x[:, None, :]
    return _forward(x, prepared["wi"], prepared["wh"], prepared["bias"],
                    prepared["wp"], prepared["wfb"], out_size=prepared["out_size"])


def init_params(key, input_size, hidden_size, output_size):
    """Deterministic synthetic params in PyTorch-native shapes (gate order [r,z,n])."""
    ks = jax.random.split(key, 8)
    H, I, O = hidden_size, input_size, output_size
    s = 1.0 / jnp.sqrt(H)
    u = lambda k, shape: jax.random.uniform(k, shape, jnp.float32, -s, s)
    return {
        # nn.GRU (single layer)
        "w_ih": u(ks[0], (3 * H, I)),
        "w_hh": u(ks[1], (3 * H, H)),
        "b_ih": u(ks[2], (3 * H,)),
        "b_hh": u(ks[3], (3 * H,)),
        # nn.LayerNorm(H)
        "ln_g": jnp.ones((H,), jnp.float32),
        "ln_b": jnp.zeros((H,), jnp.float32),
        # nn.Linear(H, H)
        "w_post": u(ks[4], (H, H)),
        "b_post": u(ks[5], (H,)),
        # nn.Linear(H, O)
        "w_fc": u(ks[6], (O, H)),
        "b_fc": u(ks[7], (O,)),
    }


def _reference(x, p):
    """Pure-JAX reference of the same forward pass (PyTorch nn.GRU math)."""
    B, T, I = x.shape
    H = p["w_hh"].shape[1]
    wi, wh = p["w_ih"].T, p["w_hh"].T
    bi, bh = p["b_ih"], p["b_hh"]
    h = jnp.zeros((B, H), jnp.float32)
    for t in range(T):
        gi = x[:, t, :] @ wi + bi
        gh = h @ wh + bh
        r = jax.nn.sigmoid(gi[:, :H] + gh[:, :H])
        z = jax.nn.sigmoid(gi[:, H:2 * H] + gh[:, H:2 * H])
        n = jnp.tanh(gi[:, 2 * H:] + r * gh[:, 2 * H:])
        h = (1.0 - z) * n + z * h
    mu = jnp.mean(h, axis=-1, keepdims=True)
    var = jnp.mean((h - mu) ** 2, axis=-1, keepdims=True)
    y = (h - mu) * jax.lax.rsqrt(var + 1e-5) * p["ln_g"] + p["ln_b"]
    y = jnp.maximum(y, 0.0) @ p["w_post"].T + p["b_post"]
    hr = h + y
    return jax.nn.sigmoid(hr @ p["w_fc"].T + p["b_fc"])


if __name__ == "__main__":
    B, T, I, H, O = 2, 8, 16, 32, 1

    key = jax.random.PRNGKey(0)
    kx, kp = jax.random.split(key)
    x = jax.random.normal(kx, (B, T, I), jnp.float32)
    params = init_params(kp, I, H, O)

    prepared = prepare_params(params)           # one-time layout prep
    out = gru_anomaly_detector(x, prepared)
    out = jax.block_until_ready(out)

    ref = _reference(x, params)
    assert out.shape == (B, O), out.shape
    assert jnp.allclose(out, ref, atol=1e-5, rtol=1e-5), (out, ref)

    print("KERNEL_OK")
</pallas_src>

<mosaic_0001>
module attributes {stable_mosaic.version = 11 : i64} {
  func.func @_gru_kernel(%arg0: memref<64x16xf32, #tpu.memory_space<vmem>>, %arg1: memref<16x96xf32, #tpu.memory_space<vmem>>, %arg2: memref<32x96xf32, #tpu.memory_space<vmem>>, %arg3: memref<8x96xf32, #tpu.memory_space<vmem>>, %arg4: memref<32x32xf32, #tpu.memory_space<vmem>>, %arg5: memref<33x128xf32, #tpu.memory_space<vmem>>, %arg6: memref<8x128xf32, #tpu.memory_space<vmem>>, %arg7: memref<64x96xf32, #tpu.memory_space<vmem>>) attributes {dimension_semantics = [], scalar_prefetch = 0 : i64, scratch_operands = 1 : i64, tpu.core_type = #tpu.core_type<tc>} {
    %c0 = arith.constant 0 : index
    %c0_0 = arith.constant 0 : index
    %0 = vector.load %arg3[%c0, %c0_0] : memref<8x96xf32, #tpu.memory_space<vmem>>, vector<1x96xf32>
    %c1 = arith.constant 1 : index
    %c0_1 = arith.constant 0 : index
    %1 = vector.load %arg3[%c1, %c0_1] : memref<8x96xf32, #tpu.memory_space<vmem>>, vector<1x32xf32>
    %c2 = arith.constant 2 : index
    %c0_2 = arith.constant 0 : index
    %2 = vector.load %arg3[%c2, %c0_2] : memref<8x96xf32, #tpu.memory_space<vmem>>, vector<1x32xf32>
    %c3 = arith.constant 3 : index
    %c0_3 = arith.constant 0 : index
    %3 = vector.load %arg3[%c3, %c0_3] : memref<8x96xf32, #tpu.memory_space<vmem>>, vector<1x32xf32>
    %c4 = arith.constant 4 : index
    %c0_4 = arith.constant 0 : index
    %4 = vector.load %arg3[%c4, %c0_4] : memref<8x96xf32, #tpu.memory_space<vmem>>, vector<1x32xf32>
    %c0_5 = arith.constant 0 : index
    %c0_6 = arith.constant 0 : index
    %5 = vector.load %arg0[%c0_5, %c0_6] : memref<64x16xf32, #tpu.memory_space<vmem>>, vector<64x16xf32>
    %c0_7 = arith.constant 0 : index
    %c0_8 = arith.constant 0 : index
    %6 = vector.load %arg1[%c0_7, %c0_8] : memref<16x96xf32, #tpu.memory_space<vmem>>, vector<16x96xf32>
    %cst = arith.constant dense<0.000000e+00> : vector<64x96xf32>
    %7 = tpu.matmul %5, %6, %cst {dimension_numbers = #tpu.dot_dimension_numbers<[1], [0], [0], [1], [0, 0, 1, 1], [], []>} : vector<64x16xf32>, vector<16x96xf32>, vector<64x96xf32> -> vector<64x96xf32>
    %8 = vector.broadcast %0 : vector<1x96xf32> to vector<64x96xf32>
    %9 = arith.addf %7, %8 : vector<64x96xf32>
    %c0_9 = arith.constant 0 : index
    %c0_10 = arith.constant 0 : index
    %10 = vector.load %arg7[%c0_9, %c0_10] : memref<64x96xf32, #tpu.memory_space<vmem>>, vector<64x96xf32>
    tpu.vector_store %arg7[%c0_9, %c0_10], %9 {strides = array<i32>} : memref<64x96xf32, #tpu.memory_space<vmem>>, vector<64x96xf32>,
    %c0_11 = arith.constant 0 : index
    %c0_12 = arith.constant 0 : index
    %11 = vector.load %arg2[%c0_11, %c0_12] : memref<32x96xf32, #tpu.memory_space<vmem>>, vector<32x96xf32>
    %12 = vector.shape_cast %1 : vector<1x32xf32> to vector<1x32xf32>
    %13 = vector.broadcast %12 : vector<1x32xf32> to vector<8x32xf32>
    %cst_13 = arith.constant 0.000000e+00 : f32
    %14 = vector.broadcast %cst_13 : f32 to vector<8x32xf32>
    %c0_14 = arith.constant 0 : index
    %c0_15 = arith.constant 0 : index
    %15 = vector.load %arg7[%c0_14, %c0_15] : memref<64x96xf32, #tpu.memory_space<vmem>>, vector<8x96xf32>
    %cst_16 = arith.constant dense<0.000000e+00> : vector<8x96xf32>
    %16 = tpu.matmul %14, %11, %cst_16 {dimension_numbers = #tpu.dot_dimension_numbers<[1], [0], [0], [1], [0, 0, 1, 1], [], []>} : vector<8x32xf32>, vector<32x96xf32>, vector<8x96xf32> -> vector<8x96xf32>
    %17 = vector.extract_strided_slice %15 {offsets = [0, 0], sizes = [8, 64], strides = [1, 1]} : vector<8x96xf32> to vector<8x64xf32>
    %18 = vector.extract_strided_slice %16 {offsets = [0, 0], sizes = [8, 64], strides = [1, 1]} : vector<8x96xf32> to vector<8x64xf32>
    %19 = arith.addf %17, %18 : vector<8x64xf32>
    %20 = arith.negf %19 : vector<8x64xf32>
    %21 = math.exp %20 : vector<8x64xf32>
    %cst_17 = arith.constant 1.000000e+00 : f32
    %22 = vector.broadcast %cst_17 : f32 to vector<8x64xf32>
    %23 = arith.addf %22, %21 : vector<8x64xf32>
    %24 = arith.divf %22, %23 : vector<8x64xf32>
    %25 = vector.extract_strided_slice %24 {offsets = [0, 0], sizes = [8, 32], strides = [1, 1]} : vector<8x64xf32> to vector<8x32xf32>
    %26 = vector.extract_strided_slice %24 {offsets = [0, 32], sizes = [8, 32], strides = [1, 1]} : vector<8x64xf32> to vector<8x32xf32>
    %27 = vector.extract_strided_slice %15 {offsets = [0, 64], sizes = [8, 32], strides = [1, 1]} : vector<8x96xf32> to vector<8x32xf32>
    %28 = vector.extract_strided_slice %16 {offsets = [0, 64], sizes = [8, 32], strides = [1, 1]} : vector<8x96xf32> to vector<8x32xf32>
    %29 = arith.addf %28, %13 : vector<8x32xf32>
    %30 = arith.mulf %25, %29 : vector<8x32xf32>
    %31 = arith.addf %27, %30 : vector<8x32xf32>
    %32 = math.tanh %31 : vector<8x32xf32>
    %cst_18 = arith.constant 1.000000e+00 : f32
    %33 = vector.broadcast %cst_18 : f32 to vector<8x32xf32>
    %34 = arith.subf %33, %26 : vector<8x32xf32>
    %35 = arith.mulf %34, %32 : vector<8x32xf32>
    %36 = arith.mulf %26, %14 : vector<8x32xf32>
    %37 = arith.addf %35, %36 : vector<8x32xf32>
    %c8 = arith.constant 8 : index
    %c0_19 = arith.constant 0 : index
    %38 = vector.load %arg7[%c8, %c0_19] : memref<64x96xf32, #tpu.memory_space<vmem>>, vector<8x96xf32>
    %cst_20 = arith.constant dense<0.000000e+00> : vector<8x96xf32>
    %39 = tpu.matmul %37, %11, %cst_20 {dimension_numbers = #tpu.dot_dimension_numbers<[1], [0], [0], [1], [0, 0, 1, 1], [], []>} : vector<8x32xf32>, vector<32x96xf32>, vector<8x96xf32> -> vector<8x96xf32>
    %40 = vector.extract_strided_slice %38 {offsets = [0, 0], sizes = [8, 64], strides = [1, 1]} : vector<8x96xf32> to vector<8x64xf32>
    %41 = vector.extract_strided_slice %39 {offsets = [0, 0], sizes = [8, 64], strides = [1, 1]} : vector<8x96xf32> to vector<8x64xf32>
    %42 = arith.addf %40, %41 : vector<8x64xf32>
    %43 = arith.negf %42 : vector<8x64xf32>
    %44 = math.exp %43 : vector<8x64xf32>
    %cst_21 = arith.constant 1.000000e+00 : f32
    %45 = vector.broadcast %cst_21 : f32 to vector<8x64xf32>
    %46 = arith.addf %45, %44 : vector<8x64xf32>
    %47 = arith.divf %45, %46 : vector<8x64xf32>
    %48 = vector.extract_strided_slice %47 {offsets = [0, 0], sizes = [8, 32], strides = [1, 1]} : vector<8x64xf32> to vector<8x32xf32>
    %49 = vector.extract_strided_slice %47 {offsets = [0, 32], sizes = [8, 32], strides = [1, 1]} : vector<8x64xf32> to vector<8x32xf32>
    %50 = vector.extract_strided_slice %38 {offsets = [0, 64], sizes = [8, 32], strides = [1, 1]} : vector<8x96xf32> to vector<8x32xf32>
    %51 = vector.extract_strided_slice %39 {offsets = [0, 64], sizes = [8, 32], strides = [1, 1]} : vector<8x96xf32> to vector<8x32xf32>
    %52 = arith.addf %51, %13 : vector<8x32xf32>
    %53 = arith.mulf %48, %52 : vector<8x32xf32>
    %54 = arith.addf %50, %53 : vector<8x32xf32>
    %55 = math.tanh %54 : vector<8x32xf32>
    %cst_22 = arith.constant 1.000000e+00 : f32
    %56 = vector.broadcast %cst_22 : f32 to vector<8x32xf32>
    %57 = arith.subf %56, %49 : vector<8x32xf32>
    %58 = arith.mulf %57, %55 : vector<8x32xf32>
    %59 = arith.mulf %49, %37 : vector<8x32xf32>
    %60 = arith.addf %58, %59 : vector<8x32xf32>
    %c16 = arith.constant 16 : index
    %c0_23 = arith.constant 0 : index
    %61 = vector.load %arg7[%c16, %c0_23] : memref<64x96xf32, #tpu.memory_space<vmem>>, vector<8x96xf32>
    %cst_24 = arith.constant dense<0.000000e+00> : vector<8x96xf32>
    %62 = tpu.matmul %60, %11, %cst_24 {dimension_numbers = #tpu.dot_dimension_numbers<[1], [0], [0], [1], [0, 0, 1, 1], [], []>} : vector<8x32xf32>, vector<32x96xf32>, vector<8x96xf32> -> vector<8x96xf32>
    %63 = vector.extract_strided_slice %61 {offsets = [0, 0], sizes = [8, 64], strides = [1, 1]} : vector<8x96xf32> to vector<8x64xf32>
    %64 = vector.extract_strided_slice %62 {offsets = [0, 0], sizes = [8, 64], strides = [1, 1]} : vector<8x96xf32> to vector<8x64xf32>
    %65 = arith.addf %63, %64 : vector<8x64xf32>
    %66 = arith.negf %65 : vector<8x64xf32>
    %67 = math.exp %66 : vector<8x64xf32>
    %cst_25 = arith.constant 1.000000e+00 : f32
    %68 = vector.broadcast %cst_25 : f32 to vector<8x64xf32>
    %69 = arith.addf %68, %67 : vector<8x64xf32>
    %70 = arith.divf %68, %69 : vector<8x64xf32>
    %71 = vector.extract_strided_slice %70 {offsets = [0, 0], sizes = [8, 32], strides = [1, 1]} : vector<8x64xf32> to vector<8x32xf32>
    %72 = vector.extract_strided_slice %70 {offsets = [0, 32], sizes = [8, 32], strides = [1, 1]} : vector<8x64xf32> to vector<8x32xf32>
    %73 = vector.extract_strided_slice %61 {offsets = [0, 64], sizes = [8, 32], strides = [1, 1]} : vector<8x96xf32> to vector<8x32xf32>
    %74 = vector.extract_strided_slice %62 {offsets = [0, 64], sizes = [8, 32], strides = [1, 1]} : vector<8x96xf32> to vector<8x32xf32>
    %75 = arith.addf %74, %13 : vector<8x32xf32>
    %76 = arith.mulf %71, %75 : vector<8x32xf32>
    %77 = arith.addf %73, %76 : vector<8x32xf32>
    %78 = math.tanh %77 : vector<8x32xf32>
    %cst_26 = arith.constant 1.000000e+00 : f32
    %79 = vector.broadcast %cst_26 : f32 to vector<8x32xf32>
    %80 = arith.subf %79, %72 : vector<8x32xf32>
    %81 = arith.mulf %80, %78 : vector<8x32xf32>
    %82 = arith.mulf %72, %60 : vector<8x32xf32>
    %83 = arith.addf %81, %82 : vector<8x32xf32>
    %c24 = arith.constant 24 : index
    %c0_27 = arith.constant 0 : index
    %84 = vector.load %arg7[%c24, %c0_27] : memref<64x96xf32, #tpu.memory_space<vmem>>, vector<8x96xf32>
    %cst_28 = arith.constant dense<0.000000e+00> : vector<8x96xf32>
    %85 = tpu.matmul %83, %11, %cst_28 {dimension_numbers = #tpu.dot_dimension_numbers<[1], [0], [0], [1], [0, 0, 1, 1], [], []>} : vector<8x32xf32>, vector<32x96xf32>, vector<8x96xf32> -> vector<8x96xf32>
    %86 = vector.extract_strided_slice %84 {offsets = [0, 0], sizes = [8, 64], strides = [1, 1]} : vector<8x96xf32> to vector<8x64xf32>
    %87 = vector.extract_strided_slice %85 {offsets = [0, 0], sizes = [8, 64], strides = [1, 1]} : vector<8x96xf32> to vector<8x64xf32>
    %88 = arith.addf %86, %87 : vector<8x64xf32>
    %89 = arith.negf %88 : vector<8x64xf32>
    %90 = math.exp %89 : vector<8x64xf32>
    %cst_29 = arith.constant 1.000000e+00 : f32
    %91 = vector.broadcast %cst_29 : f32 to vector<8x64xf32>
    %92 = arith.addf %91, %90 : vector<8x64xf32>
    %93 = arith.divf %91, %92 : vector<8x64xf32>
    %94 = vector.extract_strided_slice %93 {offsets = [0, 0], sizes = [8, 32], strides = [1, 1]} : vector<8x64xf32> to vector<8x32xf32>
    %95 = vector.extract_strided_slice %93 {offsets = [0, 32], sizes = [8, 32], strides = [1, 1]} : vector<8x64xf32> to vector<8x32xf32>
    %96 = vector.extract_strided_slice %84 {offsets = [0, 64], sizes = [8, 32], strides = [1, 1]} : vector<8x96xf32> to vector<8x32xf32>
    %97 = vector.extract_strided_slice %85 {offsets = [0, 64], sizes = [8, 32], strides = [1, 1]} : vector<8x96xf32> to vector<8x32xf32>
    %98 = arith.addf %97, %13 : vector<8x32xf32>
    %99 = arith.mulf %94, %98 : vector<8x32xf32>
    %100 = arith.addf %96, %99 : vector<8x32xf32>
    %101 = math.tanh %100 : vector<8x32xf32>
    %cst_30 = arith.constant 1.000000e+00 : f32
    %102 = vector.broadcast %cst_30 : f32 to vector<8x32xf32>
    %103 = arith.subf %102, %95 : vector<8x32xf32>
    %104 = arith.mulf %103, %101 : vector<8x32xf32>
    %105 = arith.mulf %95, %83 : vector<8x32xf32>
    %106 = arith.addf %104, %105 : vector<8x32xf32>
    %c32 = arith.constant 32 : index
    %c0_31 = arith.constant 0 : index
    %107 = vector.load %arg7[%c32, %c0_31] : memref<64x96xf32, #tpu.memory_space<vmem>>, vector<8x96xf32>
    %cst_32 = arith.constant dense<0.000000e+00> : vector<8x96xf32>
    %108 = tpu.matmul %106, %11, %cst_32 {dimension_numbers = #tpu.dot_dimension_numbers<[1], [0], [0], [1], [0, 0, 1, 1], [], []>} : vector<8x32xf32>, vector<32x96xf32>, vector<8x96xf32> -> vector<8x96xf32>
    %109 = vector.extract_strided_slice %107 {offsets = [0, 0], sizes = [8, 64], strides = [1, 1]} : vector<8x96xf32> to vector<8x64xf32>
    %110 = vector.extract_strided_slice %108 {offsets = [0, 0], sizes = [8, 64], strides = [1, 1]} : vector<8x96xf32> to vector<8x64xf32>
    %111 = arith.addf %109, %110 : vector<8x64xf32>
    %112 = arith.negf %111 : vector<8x64xf32>
    %113 = math.exp %112 : vector<8x64xf32>
    %cst_33 = arith.constant 1.000000e+00 : f32
    %114 = vector.broadcast %cst_33 : f32 to vector<8x64xf32>
    %115 = arith.addf %114, %113 : vector<8x64xf32>
    %116 = arith.divf %114, %115 : vector<8x64xf32>
    %117 = vector.extract_strided_slice %116 {offsets = [0, 0], sizes = [8, 32], strides = [1, 1]} : vector<8x64xf32> to vector<8x32xf32>
    %118 = vector.extract_strided_slice %116 {offsets = [0, 32], sizes = [8, 32], strides = [1, 1]} : vector<8x64xf32> to vector<8x32xf32>
    %119 = vector.extract_strided_slice %107 {offsets = [0, 64], sizes = [8, 32], strides = [1, 1]} : vector<8x96xf32> to vector<8x32xf32>
    %120 = vector.extract_strided_slice %108 {offsets = [0, 64], sizes = [8, 32], strides = [1, 1]} : vector<8x96xf32> to vector<8x32xf32>
    %121 = arith.addf %120, %13 : vector<8x32xf32>
    %122 = arith.mulf %117, %121 : vector<8x32xf32>
    %123 = arith.addf %119, %122 : vector<8x32xf32>
    %124 = math.tanh %123 : vector<8x32xf32>
    %cst_34 = arith.constant 1.000000e+00 : f32
    %125 = vector.broadcast %cst_34 : f32 to vector<8x32xf32>
    %126 = arith.subf %125, %118 : vector<8x32xf32>
    %127 = arith.mulf %126, %124 : vector<8x32xf32>
    %128 = arith.mulf %118, %106 : vector<8x32xf32>
    %129 = arith.addf %127, %128 : vector<8x32xf32>
    %c40 = arith.constant 40 : index
    %c0_35 = arith.constant 0 : index
    %130 = vector.load %arg7[%c40, %c0_35] : memref<64x96xf32, #tpu.memory_space<vmem>>, vector<8x96xf32>
    %cst_36 = arith.constant dense<0.000000e+00> : vector<8x96xf32>
    %131 = tpu.matmul %129, %11, %cst_36 {dimension_numbers = #tpu.dot_dimension_numbers<[1], [0], [0], [1], [0, 0, 1, 1], [], []>} : vector<8x32xf32>, vector<32x96xf32>, vector<8x96xf32> -> vector<8x96xf32>
    %132 = vector.extract_strided_slice %130 {offsets = [0, 0], sizes = [8, 64], strides = [1, 1]} : vector<8x96xf32> to vector<8x64xf32>
    %133 = vector.extract_strided_slice %131 {offsets = [0, 0], sizes = [8, 64], strides = [1, 1]} : vector<8x96xf32> to vector<8x64xf32>
    %134 = arith.addf %132, %133 : vector<8x64xf32>
    %135 = arith.negf %134 : vector<8x64xf32>
    %136 = math.exp %135 : vector<8x64xf32>
    %cst_37 = arith.constant 1.000000e+00 : f32
    %137 = vector.broadcast %cst_37 : f32 to vector<8x64xf32>
    %138 = arith.addf %137, %136 : vector<8x64xf32>
    %139 = arith.divf %137, %138 : vector<8x64xf32>
    %140 = vector.extract_strided_slice %139 {offsets = [0, 0], sizes = [8, 32], strides = [1, 1]} : vector<8x64xf32> to vector<8x32xf32>
    %141 = vector.extract_strided_slice %139 {offsets = [0, 32], sizes = [8, 32], strides = [1, 1]} : vector<8x64xf32> to vector<8x32xf32>
    %142 = vector.extract_strided_slice %130 {offsets = [0, 64], sizes = [8, 32], strides = [1, 1]} : vector<8x96xf32> to vector<8x32xf32>
    %143 = vector.extract_strided_slice %131 {offsets = [0, 64], sizes = [8, 32], strides = [1, 1]} : vector<8x96xf32> to vector<8x32xf32>
    %144 = arith.addf %143, %13 : vector<8x32xf32>
    %145 = arith.mulf %140, %144 : vector<8x32xf32>
    %146 = arith.addf %142, %145 : vector<8x32xf32>
    %147 = math.tanh %146 : vector<8x32xf32>
    %cst_38 = arith.constant 1.000000e+00 : f32
    %148 = vector.broadcast %cst_38 : f32 to vector<8x32xf32>
    %149 = arith.subf %148, %141 : vector<8x32xf32>
    %150 = arith.mulf %149, %147 : vector<8x32xf32>
    %151 = arith.mulf %141, %129 : vector<8x32xf32>
    %152 = arith.addf %150, %151 : vector<8x32xf32>
    %c48 = arith.constant 48 : index
    %c0_39 = arith.constant 0 : index
    %153 = vector.load %arg7[%c48, %c0_39] : memref<64x96xf32, #tpu.memory_space<vmem>>, vector<8x96xf32>
    %cst_40 = arith.constant dense<0.000000e+00> : vector<8x96xf32>
    %154 = tpu.matmul %152, %11, %cst_40 {dimension_numbers = #tpu.dot_dimension_numbers<[1], [0], [0], [1], [0, 0, 1, 1], [], []>} : vector<8x32xf32>, vector<32x96xf32>, vector<8x96xf32> -> vector<8x96xf32>
    %155 = vector.extract_strided_slice %153 {offsets = [0, 0], sizes = [8, 64], strides = [1, 1]} : vector<8x96xf32> to vector<8x64xf32>
    %156 = vector.extract_strided_slice %154 {offsets = [0, 0], sizes = [8, 64], strides = [1, 1]} : vector<8x96xf32> to vector<8x64xf32>
    %157 = arith.addf %155, %156 : vector<8x64xf32>
    %158 = arith.negf %157 : vector<8x64xf32>
    %159 = math.exp %158 : vector<8x64xf32>
    %cst_41 = arith.constant 1.000000e+00 : f32
    %160 = vector.broadcast %cst_41 : f32 to vector<8x64xf32>
    %161 = arith.addf %160, %159 : vector<8x64xf32>
    %162 = arith.divf %160, %161 : vector<8x64xf32>
    %163 = vector.extract_strided_slice %162 {offsets = [0, 0], sizes = [8, 32], strides = [1, 1]} : vector<8x64xf32> to vector<8x32xf32>
    %164 = vector.extract_strided_slice %162 {offsets = [0, 32], sizes = [8, 32], strides = [1, 1]} : vector<8x64xf32> to vector<8x32xf32>
    %165 = vector.extract_strided_slice %153 {offsets = [0, 64], sizes = [8, 32], strides = [1, 1]} : vector<8x96xf32> to vector<8x32xf32>
    %166 = vector.extract_strided_slice %154 {offsets = [0, 64], sizes = [8, 32], strides = [1, 1]} : vector<8x96xf32> to vector<8x32xf32>
    %167 = arith.addf %166, %13 : vector<8x32xf32>
    %168 = arith.mulf %163, %167 : vector<8x32xf32>
    %169 = arith.addf %165, %168 : vector<8x32xf32>
    %170 = math.tanh %169 : vector<8x32xf32>
    %cst_42 = arith.constant 1.000000e+00 : f32
    %171 = vector.broadcast %cst_42 : f32 to vector<8x32xf32>
    %172 = arith.subf %171, %164 : vector<8x32xf32>
    %173 = arith.mulf %172, %170 : vector<8x32xf32>
    %174 = arith.mulf %164, %152 : vector<8x32xf32>
    %175 = arith.addf %173, %174 : vector<8x32xf32>
    %c56 = arith.constant 56 : index
    %c0_43 = arith.constant 0 : index
    %176 = vector.load %arg7[%c56, %c0_43] : memref<64x96xf32, #tpu.memory_space<vmem>>, vector<8x96xf32>
    %cst_44 = arith.constant dense<0.000000e+00> : vector<8x96xf32>
    %177 = tpu.matmul %175, %11, %cst_44 {dimension_numbers = #tpu.dot_dimension_numbers<[1], [0], [0], [1], [0, 0, 1, 1], [], []>} : vector<8x32xf32>, vector<32x96xf32>, vector<8x96xf32> -> vector<8x96xf32>
    %178 = vector.extract_strided_slice %176 {offsets = [0, 0], sizes = [8, 64], strides = [1, 1]} : vector<8x96xf32> to vector<8x64xf32>
    %179 = vector.extract_strided_slice %177 {offsets = [0, 0], sizes = [8, 64], strides = [1, 1]} : vector<8x96xf32> to vector<8x64xf32>
    %180 = arith.addf %178, %179 : vector<8x64xf32>
    %181 = arith.negf %180 : vector<8x64xf32>
    %182 = math.exp %181 : vector<8x64xf32>
    %cst_45 = arith.constant 1.000000e+00 : f32
    %183 = vector.broadcast %cst_45 : f32 to vector<8x64xf32>
    %184 = arith.addf %183, %182 : vector<8x64xf32>
    %185 = arith.divf %183, %184 : vector<8x64xf32>
    %186 = vector.extract_strided_slice %185 {offsets = [0, 0], sizes = [8, 32], strides = [1, 1]} : vector<8x64xf32> to vector<8x32xf32>
    %187 = vector.extract_strided_slice %185 {offsets = [0, 32], sizes = [8, 32], strides = [1, 1]} : vector<8x64xf32> to vector<8x32xf32>
    %188 = vector.extract_strided_slice %176 {offsets = [0, 64], sizes = [8, 32], strides = [1, 1]} : vector<8x96xf32> to vector<8x32xf32>
    %189 = vector.extract_strided_slice %177 {offsets = [0, 64], sizes = [8, 32], strides = [1, 1]} : vector<8x96xf32> to vector<8x32xf32>
    %190 = arith.addf %189, %13 : vector<8x32xf32>
    %191 = arith.mulf %186, %190 : vector<8x32xf32>
    %192 = arith.addf %188, %191 : vector<8x32xf32>
    %193 = math.tanh %192 : vector<8x32xf32>
    %cst_46 = arith.constant 1.000000e+00 : f32
    %194 = vector.broadcast %cst_46 : f32 to vector<8x32xf32>
    %195 = arith.subf %194, %187 : vector<8x32xf32>
    %196 = arith.mulf %195, %193 : vector<8x32xf32>
    %197 = arith.mulf %187, %175 : vector<8x32xf32>
    %198 = arith.addf %196, %197 : vector<8x32xf32>
    %cst_47 = arith.constant dense<0.000000e+00> : vector<8xf32>
    %199 = vector.multi_reduction <add>, %198, %cst_47 [1] : vector<8x32xf32> to vector<8xf32>
    %200 = vector.shape_cast %199 : vector<8xf32> to vector<8x1xf32>
    %cst_48 = arith.constant 3.200000e+01 : f32
    %201 = vector.broadcast %cst_48 : f32 to vector<8x1xf32>
    %202 = arith.divf %200, %201 : vector<8x1xf32>
    %203 = vector.broadcast %202 : vector<8x1xf32> to vector<8x32xf32>
    %204 = arith.subf %198, %203 : vector<8x32xf32>
    %205 = arith.mulf %204, %204 : vector<8x32xf32>
    %cst_49 = arith.constant dense<0.000000e+00> : vector<8xf32>
    %206 = vector.multi_reduction <add>, %205, %cst_49 [1] : vector<8x32xf32> to vector<8xf32>
    %207 = vector.shape_cast %206 : vector<8xf32> to vector<8x1xf32>
    %cst_50 = arith.constant 3.200000e+01 : f32
    %208 = vector.broadcast %cst_50 : f32 to vector<8x1xf32>
    %209 = arith.divf %207, %208 : vector<8x1xf32>
    %210 = vector.broadcast %202 : vector<8x1xf32> to vector<8x32xf32>
    %211 = arith.subf %198, %210 : vector<8x32xf32>
    %cst_51 = arith.constant 9.99999974E-6 : f32
    %212 = vector.broadcast %cst_51 : f32 to vector<8x1xf32>
    %213 = arith.addf %209, %212 : vector<8x1xf32>
    %214 = math.rsqrt %213 : vector<8x1xf32>
    %215 = vector.broadcast %214 : vector<8x1xf32> to vector<8x32xf32>
    %216 = arith.mulf %211, %215 : vector<8x32xf32>
    %217 = vector.broadcast %2 : vector<1x32xf32> to vector<8x32xf32>
    %218 = arith.mulf %216, %217 : vector<8x32xf32>
    %219 = vector.broadcast %3 : vector<1x32xf32> to vector<8x32xf32>
    %220 = arith.addf %218, %219 : vector<8x32xf32>
    %cst_52 = arith.constant 0.000000e+00 : f32
    %221 = vector.broadcast %cst_52 : f32 to vector<8x32xf32>
    %222 = arith.maximumf %220, %221 : vector<8x32xf32>
    %c0_53 = arith.constant 0 : index
    %c0_54 = arith.constant 0 : index
    %223 = vector.load %arg4[%c0_53, %c0_54] : memref<32x32xf32, #tpu.memory_space<vmem>>, vector<32x32xf32>
    %cst_55 = arith.constant dense<0.000000e+00> : vector<8x32xf32>
    %224 = tpu.matmul %222, %223, %cst_55 {dimension_numbers = #tpu.dot_dimension_numbers<[1], [0], [0], [1], [0, 0, 1, 1], [], []>} : vector<8x32xf32>, vector<32x32xf32>, vector<8x32xf32> -> vector<8x32xf32>
    %225 = vector.broadcast %4 : vector<1x32xf32> to vector<8x32xf32>
    %226 = arith.addf %224, %225 : vector<8x32xf32>
    %227 = arith.addf %198, %226 : vector<8x32xf32>
    %c0_56 = arith.constant 0 : index
    %c0_57 = arith.constant 0 : index
    %228 = vector.load %arg5[%c0_56, %c0_57] : memref<33x128xf32, #tpu.memory_space<vmem>>, vector<32x128xf32>
    %c32_58 = arith.constant 32 : index
    %c0_59 = arith.constant 0 : index
    %229 = vector.load %arg5[%c32_58, %c0_59] : memref<33x128xf32, #tpu.memory_space<vmem>>, vector<1x128xf32>
    %cst_60 = arith.constant dense<0.000000e+00> : vector<8x128xf32>
    %230 = tpu.matmul %227, %228, %cst_60 {dimension_numbers = #tpu.dot_dimension_numbers<[1], [0], [0], [1], [0, 0, 1, 1], [], []>} : vector<8x32xf32>, vector<32x128xf32>, vector<8x128xf32> -> vector<8x128xf32>
    %231 = vector.broadcast %229 : vector<1x128xf32> to vector<8x128xf32>
    %232 = arith.addf %230, %231 : vector<8x128xf32>
    %233 = arith.negf %232 : vector<8x128xf32>
    %234 = math.exp %233 : vector<8x128xf32>
    %cst_61 = arith.constant 1.000000e+00 : f32
    %235 = vector.broadcast %cst_61 : f32 to vector<8x128xf32>
    %236 = arith.addf %235, %234 : vector<8x128xf32>
    %237 = arith.divf %235, %236 : vector<8x128xf32>
    %c0_62 = arith.constant 0 : index
    %c0_63 = arith.constant 0 : index
    %238 = vector.load %arg6[%c0_62, %c0_63] : memref<8x128xf32, #tpu.memory_space<vmem>>, vector<8x128xf32>
    tpu.vector_store %arg6[%c0_62, %c0_63], %237 {strides = array<i32>} : memref<8x128xf32, #tpu.memory_space<vmem>>, vector<8x128xf32>,
    return
  }
}

</mosaic_0001>

<llo_original>
// kernel: _forward.1
$region0: #{_forward.1}
  #allocation0 [shape = 'u32[]', space=smem, size = 0x4, offset = 0x4, fixed_abs, tag = 'smem constant byte address 0x4 - core index']
  #allocation1 [shape = 'u32[144,128]{1,0:T(1,128)}', space=vmem, size = 0x12000, scoped, tag = 'internal scratch']
  #allocation2 [shape = 'f32[64,96]{1,0:T(8,128)}', space=vmem, size = 0x8000, scoped, tag = 'scratch operand']
  %s0 = inlined_call_operand.vmem [shape: f32[64,16], index: 0, kind: input, shape index: {}]
  %s1 = inlined_call_operand.hbm [shape: f32[16,96], index: 1, kind: input, shape index: {}]
  %s2 = inlined_call_operand.vmem [shape: f32[32,96], index: 2, kind: input, shape index: {}]
  %s3 = inlined_call_operand.vmem [shape: f32[8,96], index: 3, kind: input, shape index: {}]
  %s4 = inlined_call_operand.vmem [shape: f32[32,32], index: 4, kind: input, shape index: {}]
  %s5 = inlined_call_operand.vmem [shape: f32[33,128], index: 5, kind: input, shape index: {}]
  %s6 = inlined_call_operand.vmem [shape: f32[8,128], index: 6, kind: output, shape index: {}]
  %s7 = sld [smem:[#allocation0]]
  $region38: #{_forward.1} parent=0
    _
  %s9 = ssub.s32 1, %s7
  %s10 = scalar_select 0, %s9, %s7
  $region1: #{_forward.1} parent=0
    #allocation3 [shape = 'u8[8192]{0}', space=vmem, size = 0x2000, scoped, tag = 'input window, operand 1, single buffered']
    #allocation4 [shape = 's32[1]{0}', space=sflag, size = 0x4, scoped, tag = 'scoped memory for _forward.1']
    %11 = vsyncpa [#allocation4], 0
    // Predicated region
    $region2: #{_forward.1} parent=1 // pred_check
      _
    $region3: #{_forward.1} parent=1 // pred_check_branch
      %13 = sbr.rel (0) target = $region5
    $region4: #{_forward.1} parent=1 // pred_region
      _
    $region5: #{_forward.1} parent=1 // pred_fallthru
      _
    // Predicated region
    $region6: #{_forward.1} parent=1 // pred_check
      _
    $region7: #{_forward.1} parent=1 // pred_check_branch
      %15 = sbr.rel (0) target = $region9
    $region8: #{_forward.1} parent=1 // pred_region
      %s17 = ssub.s32 256, 256
      %18 = vsyncadd [#allocation4], %s17
      %s19 = sshll.u32 [#allocation3], 4
      %s20 = int_to_ptr.vmem [resolvable:$true] %s19
      %25 = dma.hbm_to_vmem [thread:$0]  %s1, 256, %s20, [#allocation4], 128, 128, 8
    $region9: #{_forward.1} parent=1 // pred_fallthru
      _
    // Predicated region
    $region10: #{_forward.1} parent=1 // pred_check
      _
    $region11: #{_forward.1} parent=1 // pred_check_branch
      %27 = sbr.rel (0) target = $region13
    $region12: #{_forward.1} parent=1 // pred_region
      _
    $region13: #{_forward.1} parent=1 // pred_fallthru
      _
    // Predicated region
    $region14: #{_forward.1} parent=1 // pred_check
      _
    $region15: #{_forward.1} parent=1 // pred_check_branch
      %29 = sbr.rel (0) target = $region17
    $region16: #{_forward.1} parent=1 // pred_region
      _
    $region17: #{_forward.1} parent=1 // pred_fallthru
      _
    // Predicated region
    $region18: #{_forward.1} parent=1 // pred_check
      _
    $region19: #{_forward.1} parent=1 // pred_check_branch
      %31 = sbr.rel (0) target = $region21
    $region20: #{_forward.1} parent=1 // pred_region
      _
    $region21: #{_forward.1} parent=1 // pred_fallthru
      _
    // Predicated region
    $region22: #{_forward.1} parent=1 // pred_check
      _
    $region23: #{_forward.1} parent=1 // pred_check_branch
      %33 = sbr.rel (0) target = $region25
    $region24: #{_forward.1} parent=1 // pred_region
      _
    $region25: #{_forward.1} parent=1 // pred_fallthru
      _
    // Predicated region
    $region26: #{_forward.1} parent=1 // pred_check
      _
    $region27: #{_forward.1} parent=1 // pred_check_branch
      %35 = sbr.rel (0) target = $region29
    $region28: #{_forward.1} parent=1 // pred_region
      %36 = dma.done [#allocation4], 256
    $region29: #{_forward.1} parent=1 // pred_fallthru
      _
    %v37 = vld [vmem:[%s3] sm:$0x1]
    %v38 = vld [vmem:[%s3 + $0x1] sm:$0x1]
    %v39 = vld [vmem:[%s3 + $0x2] sm:$0x1]
    %v40 = vld [vmem:[%s3 + $0x3] sm:$0x1]
    %v41 = vld [vmem:[%s3 + $0x4] sm:$0x1]
    %v42 = vld [vmem:[%s0] sm:$0xff]
    %v43 = vld [vmem:[%s0 + $0x8] sm:$0xff]
    %v44 = vld [vmem:[%s0 + $0x10] sm:$0xff]
    %v45 = vld [vmem:[%s0 + $0x18] sm:$0xff]
    %v46 = vld [vmem:[%s0 + $0x20] sm:$0xff]
    %v47 = vld [vmem:[%s0 + $0x28] sm:$0xff]
    %v48 = vld [vmem:[%s0 + $0x30] sm:$0xff]
    %v49 = vld [vmem:[%s0 + $0x38] sm:$0xff]
    %v50 = vld [vmem:[#allocation3] sm:$0xff]
    %v51 = vld [vmem:[#allocation3 + $0x8] sm:$0xff]
    %v52 = vlaneseq
    %v53 = vshrl.u32 %v52, 7
    %v54 = vsub.s32 0, %v53
    %v55 = vrot.slane %v37, %v54
    %vm56 = vcmask 130048
    %v58 = vsel %vm56, %v42, 0
    %v61 = vsel %vm56, %v43, 0
    %v64 = vsel %vm56, %v44, 0
    %v67 = vsel %vm56, %v45, 0
    %v70 = vsel %vm56, %v46, 0
    %v73 = vsel %vm56, %v47, 0
    %v76 = vsel %vm56, %v48, 0
    %v79 = vsel %vm56, %v49, 0
    %81 = vmatprep.subr.mxu0 0.0
    %82 = vmatpush1.msra.mxu0 %v50
    %83 = vmatprep.subr.mxu0 0.0
    %84 = vmatpush1.msra.mxu0 %v51
    %85 = vmatprep.subr.mxu0 0.0
    %86 = vmatpush1.msra.mxu0 0.0
    %87 = vmatprep.subr.mxu0 0.0
    %88 = vmatpush1.msra.mxu0 0.0
    %89 = vmatprep.subr.mxu0 0.0
    %90 = vmatpush1.msra.mxu0 0.0
    %91 = vmatprep.subr.mxu0 0.0
    %92 = vmatpush1.msra.mxu0 0.0
    %93 = vmatprep.subr.mxu0 0.0
    %94 = vmatpush1.msra.mxu0 0.0
    %95 = vmatprep.subr.mxu0 0.0
    %96 = vmatpush1.msra.mxu0 0.0
    %97 = vmatprep.subr.mxu0 0.0
    %98 = vmatpush1.msra.mxu0 0.0
    %99 = vmatprep.subr.mxu0 0.0
    %100 = vmatpush1.msra.mxu0 0.0
    %101 = vmatprep.subr.mxu0 0.0
    %102 = vmatpush1.msra.mxu0 0.0
    %103 = vmatprep.subr.mxu0 0.0
    %104 = vmatpush1.msra.mxu0 0.0
    %105 = vmatprep.subr.mxu0 0.0
    %106 = vmatpush1.msra.mxu0 0.0
    %107 = vmatprep.subr.mxu0 0.0
    %108 = vmatpush1.msra.mxu0 0.0
    %109 = vmatprep.subr.mxu0 0.0
    %110 = vmatpush1.msra.mxu0 0.0
    %111 = vmatprep.subr.mxu0 0.0
    %112 = vmatpush1.msra.mxu0 0.0
    %113 = vmatprep.subr.mxu0 0.0
    %114 = vmatpush1.msra.mxu0 0.0
    %115 = vmatprep.subr.mxu0 0.0
    %116 = vmatpush1.msra.mxu0 0.0
    %117 = vmatprep.subr.mxu0 0.0
    %118 = vmatpush1.msra.mxu0 0.0
    %119 = vmatprep.subr.mxu0 0.0
    %120 = vmatpush1.msra.mxu0 0.0
    %121 = vmatprep.subr.mxu0 0.0
    %122 = vmatpush1.msra.mxu0 0.0
    %123 = vmatprep.subr.mxu0 0.0
    %124 = vmatpush1.msra.mxu0 0.0
    %125 = vmatprep.subr.mxu0 0.0
    %126 = vmatpush1.msra.mxu0 0.0
    %127 = vmatprep.subr.mxu0 0.0
    %128 = vmatpush1.msra.mxu0 0.0
    %129 = vmatprep.subr.mxu0 0.0
    %130 = vmatpush1.msra.mxu0 0.0
    %131 = vmatprep.subr.mxu0 0.0
    %132 = vmatpush1.msra.mxu0 0.0
    %133 = vmatprep.subr.mxu0 0.0
    %134 = vmatpush1.msra.mxu0 0.0
    %135 = vmatprep.subr.mxu0 0.0
    %136 = vmatpush1.msra.mxu0 0.0
    %137 = vmatprep.subr.mxu0 0.0
    %138 = vmatpush1.msra.mxu0 0.0
    %139 = vmatprep.subr.mxu0 0.0
    %140 = vmatpush1.msra.mxu0 0.0
    %141 = vmatprep.subr.mxu0 0.0
    %142 = vmatpush1.msra.mxu0 0.0
    %143 = vmatprep.subr.mxu0 0.0
    %144 = vmatpush1.msra.mxu0 0.0
    %145 = vmatprep.mubr.f32.mxu0 0.0
    %146 = vmatmul.mubr.f32.gmra.mrb[0].mxu0 %v58
    %v147 = vpop.f32.mrb[0].mxu0
    %v148 = vadd.f32 %v55, %v147
    %v149 = vpop.f32.mrb[0].mxu0
    %150 = vmatprep.mubr.f32.mxu0 0.0
    %151 = vmatmul.mubr.f32.gmra.mrb[0].mxu0 %v61
    %v152 = vpop.f32.mrb[0].mxu0
    %v153 = vadd.f32 %v55, %v152
    %v154 = vpop.f32.mrb[0].mxu0
    %155 = vmatprep.mubr.f32.mxu0 0.0
    %156 = vmatmul.mubr.f32.gmra.mrb[0].mxu0 %v64
    %v157 = vpop.f32.mrb[0].mxu0
    %v158 = vadd.f32 %v55, %v157
    %v159 = vpop.f32.mrb[0].mxu0
    %160 = vmatprep.mubr.f32.mxu0 0.0
    %161 = vmatmul.mubr.f32.gmra.mrb[0].mxu0 %v67
    %v162 = vpop.f32.mrb[0].mxu0
    %v163 = vadd.f32 %v55, %v162
    %v164 = vpop.f32.mrb[0].mxu0
    %165 = vmatprep.mubr.f32.mxu0 0.0
    %166 = vmatmul.mubr.f32.gmra.mrb[0].mxu0 %v70
    %v167 = vpop.f32.mrb[0].mxu0
    %v168 = vadd.f32 %v55, %v167
    %v169 = vpop.f32.mrb[0].mxu0
    %170 = vmatprep.mubr.f32.mxu0 0.0
    %171 = vmatmul.mubr.f32.gmra.mrb[0].mxu0 %v73
    %v172 = vpop.f32.mrb[0].mxu0
    %v173 = vadd.f32 %v55, %v172
    %v174 = vpop.f32.mrb[0].mxu0
    %175 = vmatprep.mubr.f32.mxu0 0.0
    %176 = vmatmul.mubr.f32.gmra.mrb[0].mxu0 %v76
    %v177 = vpop.f32.mrb[0].mxu0
    %v178 = vadd.f32 %v55, %v177
    %v179 = vpop.f32.mrb[0].mxu0
    %180 = vmatprep.mubr.f32.mxu0 0.0
    %181 = vmatmul.mubr.f32.gmra.mrb[0].mxu0 %v79
    %v182 = vpop.f32.mrb[0].mxu0
    %v183 = vadd.f32 %v55, %v182
    %v184 = vpop.f32.mrb[0].mxu0
    %185 = vdwg.mxu0
    %vm186 = vcmask 785408
    %187 = vst.msk [vmem:[#allocation2] sm:$0xff] %vm186, %v148
    %188 = vst.msk [vmem:[#allocation2 + $0x8] sm:$0xff] %vm186, %v153
    %189 = vst.msk [vmem:[#allocation2 + $0x10] sm:$0xff] %vm186, %v158
    %190 = vst.msk [vmem:[#allocation2 + $0x18] sm:$0xff] %vm186, %v163
    %191 = vst.msk [vmem:[#allocation2 + $0x20] sm:$0xff] %vm186, %v168
    %192 = vst.msk [vmem:[#allocation2 + $0x28] sm:$0xff] %vm186, %v173
    %193 = vst.msk [vmem:[#allocation2 + $0x30] sm:$0xff] %vm186, %v178
    %194 = vst.msk [vmem:[#allocation2 + $0x38] sm:$0xff] %vm186, %v183
    %v195 = vld [vmem:[%s2] sm:$0xff]
    %v196 = vld [vmem:[%s2 + $0x8] sm:$0xff]
    %v197 = vld [vmem:[%s2 + $0x10] sm:$0xff]
    %v198 = vld [vmem:[%s2 + $0x18] sm:$0xff]
    %v199 = vlaneseq
    %v200 = vshrl.u32 %v199, 7
    %v201 = vsub.s32 0, %v200
    %v202 = vrot.slane %v38, %v201
    %v203 = vld [vmem:[#allocation2] sm:$0xff]
    %vm204 = vcmask 261120
    %v206 = vsel %vm204, 0.0, 0
    %208 = vmatprep.subr.mxu0 0.0
    %209 = vmatpush1.msra.mxu0 %v195
    %210 = vmatprep.subr.mxu0 0.0
    %211 = vmatpush1.msra.mxu0 %v196
    %212 = vmatprep.subr.mxu0 0.0
    %213 = vmatpush1.msra.mxu0 %v197
    %214 = vmatprep.subr.mxu0 0.0
    %215 = vmatpush1.msra.mxu0 %v198
    %216 = vmatprep.subr.mxu0 0.0
    %217 = vmatpush1.msra.mxu0 0.0
    %218 = vmatprep.subr.mxu0 0.0
    %219 = vmatpush1.msra.mxu0 0.0
    %220 = vmatprep.subr.mxu0 0.0
    %221 = vmatpush1.msra.mxu0 0.0
    %222 = vmatprep.subr.mxu0 0.0
    %223 = vmatpush1.msra.mxu0 0.0
    %224 = vmatprep.subr.mxu0 0.0
    %225 = vmatpush1.msra.mxu0 0.0
    %226 = vmatprep.subr.mxu0 0.0
    %227 = vmatpush1.msra.mxu0 0.0
    %228 = vmatprep.subr.mxu0 0.0
    %229 = vmatpush1.msra.mxu0 0.0
    %230 = vmatprep.subr.mxu0 0.0
    %231 = vmatpush1.msra.mxu0 0.0
    %232 = vmatprep.subr.mxu0 0.0
    %233 = vmatpush1.msra.mxu0 0.0
    %234 = vmatprep.subr.mxu0 0.0
    %235 = vmatpush1.msra.mxu0 0.0
    %236 = vmatprep.subr.mxu0 0.0
    %237 = vmatpush1.msra.mxu0 0.0
    %238 = vmatprep.subr.mxu0 0.0
    %239 = vmatpush1.msra.mxu0 0.0
    %240 = vmatprep.subr.mxu0 0.0
    %241 = vmatpush1.msra.mxu0 0.0
    %242 = vmatprep.subr.mxu0 0.0
    %243 = vmatpush1.msra.mxu0 0.0
    %244 = vmatprep.subr.mxu0 0.0
    %245 = vmatpush1.msra.mxu0 0.0
    %246 = vmatprep.subr.mxu0 0.0
    %247 = vmatpush1.msra.mxu0 0.0
    %248 = vmatprep.subr.mxu0 0.0
    %249 = vmatpush1.msra.mxu0 0.0
    %250 = vmatprep.subr.mxu0 0.0
    %251 = vmatpush1.msra.mxu0 0.0
    %252 = vmatprep.subr.mxu0 0.0
    %253 = vmatpush1.msra.mxu0 0.0
    %254 = vmatprep.subr.mxu0 0.0
    %255 = vmatpush1.msra.mxu0 0.0
    %256 = vmatprep.subr.mxu0 0.0
    %257 = vmatpush1.msra.mxu0 0.0
    %258 = vmatprep.subr.mxu0 0.0
    %259 = vmatpush1.msra.mxu0 0.0
    %260 = vmatprep.subr.mxu0 0.0
    %261 = vmatpush1.msra.mxu0 0.0
    %262 = vmatprep.subr.mxu0 0.0
    %263 = vmatpush1.msra.mxu0 0.0
    %264 = vmatprep.subr.mxu0 0.0
    %265 = vmatpush1.msra.mxu0 0.0
    %266 = vmatprep.subr.mxu0 0.0
    %267 = vmatpush1.msra.mxu0 0.0
    %268 = vmatprep.subr.mxu0 0.0
    %269 = vmatpush1.msra.mxu0 0.0
    %270 = vmatprep.subr.mxu0 0.0
    %271 = vmatpush1.msra.mxu0 0.0
    %272 = vmatprep.mubr.f32.mxu0 0.0
    %273 = vmatmul.mubr.f32.gmra.mrb[0].mxu0 %v206
    %v274 = vpop.f32.mrb[0].mxu0
    %v275 = vadd.f32 0.0, %v274
    %v276 = vpop.f32.mrb[0].mxu0
    %277 = vdwg.mxu0
    %v278 = vadd.f32 %v203, %v275
    %v279 = vxor.u32 %v278, 2147483648
    %v280 = vmul.f32 %v279, 1.442695
    %v281 = vpow.pop %v280
    %v282 = vadd.f32 %v281, 1.0
    %v283 = vrcp.pop %v282
    %v284 = vmul.f32 1.0, %v283
    %286 = vrot.lane.b32.xlu0 %v202, 64
    %v287 = vpop.permute.xlu0 %286
    %v289 = vadd.f32 %v275, %v287
    %291 = vrot.lane.b32.xlu0 %v289, 64
    %v292 = vpop.permute.xlu0 %291
    %v294 = vmul.f32 %v284, %v292
    %296 = vrot.lane.b32.xlu0 %v294, 64
    %v297 = vpop.permute.xlu0 %296
    %v299 = vadd.f32 %v203, %v297
    %v300 = vtanh.pop %v299
    %v301 = vsub.f32 1.0, %v284
    %303 = vrot.lane.b32.xlu0 %v300, 96
    %v304 = vpop.permute.xlu0 %303
    %v306 = vmul.f32 %v301, %v304
    %v307 = vmul.f32 %v284, 0.0
    %v308 = vadd.f32 %v306, %v307
    %v309 = vld [vmem:[#allocation2 + $0x8] sm:$0xff]
    %311 = vrot.lane.b32.xlu0 %v308, 96
    %v312 = vpop.permute.xlu0 %311
    %v313 = vsel %vm204, %v312, 0
    %315 = vmatprep.subr.mxu0 0.0
    %316 = vmatpush1.msra.mxu0 %v195
    %317 = vmatprep.subr.mxu0 0.0
    %318 = vmatpush1.msra.mxu0 %v196
    %319 = vmatprep.subr.mxu0 0.0
    %320 = vmatpush1.msra.mxu0 %v197
    %321 = vmatprep.subr.mxu0 0.0
    %322 = vmatpush1.msra.mxu0 %v198
    %323 = vmatprep.subr.mxu0 0.0
    %324 = vmatpush1.msra.mxu0 0.0
    %325 = vmatprep.subr.mxu0 0.0
    %326 = vmatpush1.msra.mxu0 0.0
    %327 = vmatprep.subr.mxu0 0.0
    %328 = vmatpush1.msra.mxu0 0.0
    %329 = vmatprep.subr.mxu0 0.0
    %330 = vmatpush1.msra.mxu0 0.0
    %331 = vmatprep.subr.mxu0 0.0
    %332 = vmatpush1.msra.mxu0 0.0
    %333 = vmatprep.subr.mxu0 0.0
    %334 = vmatpush1.msra.mxu0 0.0
    %335 = vmatprep.subr.mxu0 0.0
    %336 = vmatpush1.msra.mxu0 0.0
    %337 = vmatprep.subr.mxu0 0.0
    %338 = vmatpush1.msra.mxu0 0.0
    %339 = vmatprep.subr.mxu0 0.0
    %340 = vmatpush1.msra.mxu0 0.0
    %341 = vmatprep.subr.mxu0 0.0
    %342 = vmatpush1.msra.mxu0 0.0
    %343 = vmatprep.subr.mxu0 0.0
    %344 = vmatpush1.msra.mxu0 0.0
    %345 = vmatprep.subr.mxu0 0.0
    %346 = vmatpush1.msra.mxu0 0.0
    %347 = vmatprep.subr.mxu0 0.0
    %348 = vmatpush1.msra.mxu0 0.0
    %349 = vmatprep.subr.mxu0 0.0
    %350 = vmatpush1.msra.mxu0 0.0
    %351 = vmatprep.subr.mxu0 0.0
    %352 = vmatpush1.msra.mxu0 0.0
    %353 = vmatprep.subr.mxu0 0.0
    %354 = vmatpush1.msra.mxu0 0.0
    %355 = vmatprep.subr.mxu0 0.0
    %356 = vmatpush1.msra.mxu0 0.0
    %357 = vmatprep.subr.mxu0 0.0
    %358 = vmatpush1.msra.mxu0 0.0
    %359 = vmatprep.subr.mxu0 0.0
    %360 = vmatpush1.msra.mxu0 0.0
    %361 = vmatprep.subr.mxu0 0.0
    %362 = vmatpush1.msra.mxu0 0.0
    %363 = vmatprep.subr.mxu0 0.0
    %364 = vmatpush1.msra.mxu0 0.0
    %365 = vmatprep.subr.mxu0 0.0
    %366 = vmatpush1.msra.mxu0 0.0
    %367 = vmatprep.subr.mxu0 0.0
    %368 = vmatpush1.msra.mxu0 0.0
    %369 = vmatprep.subr.mxu0 0.0
    %370 = vmatpush1.msra.mxu0 0.0
    %371 = vmatprep.subr.mxu0 0.0
    %372 = vmatpush1.msra.mxu0 0.0
    %373 = vmatprep.subr.mxu0 0.0
    %374 = vmatpush1.msra.mxu0 0.0
    %375 = vmatprep.subr.mxu0 0.0
    %376 = vmatpush1.msra.mxu0 0.0
    %377 = vmatprep.subr.mxu0 0.0
    %378 = vmatpush1.msra.mxu0 0.0
    %379 = vmatprep.mubr.f32.mxu0 0.0
    %380 = vmatmul.mubr.f32.gmra.mrb[0].mxu0 %v313
    %v381 = vpop.f32.mrb[0].mxu0
    %v382 = vadd.f32 0.0, %v381
    %v383 = vpop.f32.mrb[0].mxu0
    %384 = vdwg.mxu0
    %v385 = vadd.f32 %v309, %v382
    %v386 = vxor.u32 %v385, 2147483648
    %v387 = vmul.f32 %v386, 1.442695
    %v388 = vpow.pop %v387
    %v389 = vadd.f32 %v388, 1.0
    %v390 = vrcp.pop %v389
    %v391 = vmul.f32 1.0, %v390
    %v392 = vadd.f32 %v382, %v287
    %394 = vrot.lane.b32.xlu0 %v392, 64
    %v395 = vpop.permute.xlu0 %394
    %v397 = vmul.f32 %v391, %v395
    %399 = vrot.lane.b32.xlu0 %v397, 64
    %v400 = vpop.permute.xlu0 %399
    %v402 = vadd.f32 %v309, %v400
    %v403 = vtanh.pop %v402
    %v404 = vsub.f32 1.0, %v391
    %406 = vrot.lane.b32.xlu0 %v403, 96
    %v407 = vpop.permute.xlu0 %406
    %v409 = vmul.f32 %v404, %v407
    %v410 = vmul.f32 %v391, %v308
    %v411 = vadd.f32 %v409, %v410
    %v412 = vld [vmem:[#allocation2 + $0x10] sm:$0xff]
    %414 = vrot.lane.b32.xlu0 %v411, 96
    %v415 = vpop.permute.xlu0 %414
    %v416 = vsel %vm204, %v415, 0
    %418 = vmatprep.subr.mxu0 0.0
    %419 = vmatpush1.msra.mxu0 %v195
    %420 = vmatprep.subr.mxu0 0.0
    %421 = vmatpush1.msra.mxu0 %v196
    %422 = vmatprep.subr.mxu0 0.0
    %423 = vmatpush1.msra.mxu0 %v197
    %424 = vmatprep.subr.mxu0 0.0
    %425 = vmatpush1.msra.mxu0 %v198
    %426 = vmatprep.subr.mxu0 0.0
    %427 = vmatpush1.msra.mxu0 0.0
    %428 = vmatprep.subr.mxu0 0.0
    %429 = vmatpush1.msra.mxu0 0.0
    %430 = vmatprep.subr.mxu0 0.0
    %431 = vmatpush1.msra.mxu0 0.0
    %432 = vmatprep.subr.mxu0 0.0
    %433 = vmatpush1.msra.mxu0 0.0
    %434 = vmatprep.subr.mxu0 0.0
    %435 = vmatpush1.msra.mxu0 0.0
    %436 = vmatprep.subr.mxu0 0.0
    %437 = vmatpush1.msra.mxu0 0.0
    %438 = vmatprep.subr.mxu0 0.0
    %439 = vmatpush1.msra.mxu0 0.0
    %440 = vmatprep.subr.mxu0 0.0
    %441 = vmatpush1.msra.mxu0 0.0
    %442 = vmatprep.subr.mxu0 0.0
    %443 = vmatpush1.msra.mxu0 0.0
    %444 = vmatprep.subr.mxu0 0.0
    %445 = vmatpush1.msra.mxu0 0.0
    %446 = vmatprep.subr.mxu0 0.0
    %447 = vmatpush1.msra.mxu0 0.0
    %448 = vmatprep.subr.mxu0 0.0
    %449 = vmatpush1.msra.mxu0 0.0
    %450 = vmatprep.subr.mxu0 0.0
    %451 = vmatpush1.msra.mxu0 0.0
    %452 = vmatprep.subr.mxu0 0.0
    %453 = vmatpush1.msra.mxu0 0.0
    %454 = vmatprep.subr.mxu0 0.0
    %455 = vmatpush1.msra.mxu0 0.0
    %456 = vmatprep.subr.mxu0 0.0
    %457 = vmatpush1.msra.mxu0 0.0
    %458 = vmatprep.subr.mxu0 0.0
    %459 = vmatpush1.msra.mxu0 0.0
    %460 = vmatprep.subr.mxu0 0.0
    %461 = vmatpush1.msra.mxu0 0.0
    %462 = vmatprep.subr.mxu0 0.0
    %463 = vmatpush1.msra.mxu0 0.0
    %464 = vmatprep.subr.mxu0 0.0
    %465 = vmatpush1.msra.mxu0 0.0
    %466 = vmatprep.subr.mxu0 0.0
    %467 = vmatpush1.msra.mxu0 0.0
    %468 = vmatprep.subr.mxu0 0.0
    %469 = vmatpush1.msra.mxu0 0.0
    %470 = vmatprep.subr.mxu0 0.0
    %471 = vmatpush1.msra.mxu0 0.0
    %472 = vmatprep.subr.mxu0 0.0
    %473 = vmatpush1.msra.mxu0 0.0
    %474 = vmatprep.subr.mxu0 0.0
    %475 = vmatpush1.msra.mxu0 0.0
    %476 = vmatprep.subr.mxu0 0.0
    %477 = vmatpush1.msra.mxu0 0.0
    %478 = vmatprep.subr.mxu0 0.0
    %479 = vmatpush1.msra.mxu0 0.0
    %480 = vmatprep.subr.mxu0 0.0
    %481 = vmatpush1.msra.mxu0 0.0
    %482 = vmatprep.mubr.f32.mxu0 0.0
    %483 = vmatmul.mubr.f32.gmra.mrb[0].mxu0 %v416
    %v484 = vpop.f32.mrb[0].mxu0
    %v485 = vadd.f32 0.0, %v484
    %v486 = vpop.f32.mrb[0].mxu0
    %487 = vdwg.mxu0
    %v488 = vadd.f32 %v412, %v485
    %v489 = vxor.u32 %v488, 2147483648
    %v490 = vmul.f32 %v489, 1.442695
    %v491 = vpow.pop %v490
    %v492 = vadd.f32 %v491, 1.0
    %v493 = vrcp.pop %v492
    %v494 = vmul.f32 1.0, %v493
    %v495 = vadd.f32 %v485, %v287
    %497 = vrot.lane.b32.xlu0 %v495, 64
    %v498 = vpop.permute.xlu0 %497
    %v500 = vmul.f32 %v494, %v498
    %502 = vrot.lane.b32.xlu0 %v500, 64
    %v503 = vpop.permute.xlu0 %502
    %v505 = vadd.f32 %v412, %v503
    %v506 = vtanh.pop %v505
    %v507 = vsub.f32 1.0, %v494
    %509 = vrot.lane.b32.xlu0 %v506, 96
    %v510 = vpop.permute.xlu0 %509
    %v512 = vmul.f32 %v507, %v510
    %v513 = vmul.f32 %v494, %v411
    %v514 = vadd.f32 %v512, %v513
    %v515 = vld [vmem:[#allocation2 + $0x18] sm:$0xff]
    %517 = vrot.lane.b32.xlu0 %v514, 96
    %v518 = vpop.permute.xlu0 %517
    %v519 = vsel %vm204, %v518, 0
    %521 = vmatprep.subr.mxu0 0.0
    %522 = vmatpush1.msra.mxu0 %v195
    %523 = vmatprep.subr.mxu0 0.0
    %524 = vmatpush1.msra.mxu0 %v196
    %525 = vmatprep.subr.mxu0 0.0
    %526 = vmatpush1.msra.mxu0 %v197
    %527 = vmatprep.subr.mxu0 0.0
    %528 = vmatpush1.msra.mxu0 %v198
    %529 = vmatprep.subr.mxu0 0.0
    %530 = vmatpush1.msra.mxu0 0.0
    %531 = vmatprep.subr.mxu0 0.0
    %532 = vmatpush1.msra.mxu0 0.0
    %533 = vmatprep.subr.mxu0 0.0
    %534 = vmatpush1.msra.mxu0 0.0
    %535 = vmatprep.subr.mxu0 0.0
    %536 = vmatpush1.msra.mxu0 0.0
    %537 = vmatprep.subr.mxu0 0.0
    %538 = vmatpush1.msra.mxu0 0.0
    %539 = vmatprep.subr.mxu0 0.0
    %540 = vmatpush1.msra.mxu0 0.0
    %541 = vmatprep.subr.mxu0 0.0
    %542 = vmatpush1.msra.mxu0 0.0
    %543 = vmatprep.subr.mxu0 0.0
    %544 = vmatpush1.msra.mxu0 0.0
    %545 = vmatprep.subr.mxu0 0.0
    %546 = vmatpush1.msra.mxu0 0.0
    %547 = vmatprep.subr.mxu0 0.0
    %548 = vmatpush1.msra.mxu0 0.0
    %549 = vmatprep.subr.mxu0 0.0
    %550 = vmatpush1.msra.mxu0 0.0
    %551 = vmatprep.subr.mxu0 0.0
    %552 = vmatpush1.msra.mxu0 0.0
    %553 = vmatprep.subr.mxu0 0.0
    %554 = vmatpush1.msra.mxu0 0.0
    %555 = vmatprep.subr.mxu0 0.0
    %556 = vmatpush1.msra.mxu0 0.0
    %557 = vmatprep.subr.mxu0 0.0
    %558 = vmatpush1.msra.mxu0 0.0
    %559 = vmatprep.subr.mxu0 0.0
    %560 = vmatpush1.msra.mxu0 0.0
    %561 = vmatprep.subr.mxu0 0.0
    %562 = vmatpush1.msra.mxu0 0.0
    %563 = vmatprep.subr.mxu0 0.0
    %564 = vmatpush1.msra.mxu0 0.0
    %565 = vmatprep.subr.mxu0 0.0
    %566 = vmatpush1.msra.mxu0 0.0
    %567 = vmatprep.subr.mxu0 0.0
    %568 = vmatpush1.msra.mxu0 0.0
    %569 = vmatprep.subr.mxu0 0.0
    %570 = vmatpush1.msra.mxu0 0.0
    %571 = vmatprep.subr.mxu0 0.0
    %572 = vmatpush1.msra.mxu0 0.0
    %573 = vmatprep.subr.mxu0 0.0
    %574 = vmatpush1.msra.mxu0 0.0
    %575 = vmatprep.subr.mxu0 0.0
    %576 = vmatpush1.msra.mxu0 0.0
    %577 = vmatprep.subr.mxu0 0.0
    %578 = vmatpush1.msra.mxu0 0.0
    %579 = vmatprep.subr.mxu0 0.0
    %580 = vmatpush1.msra.mxu0 0.0
    %581 = vmatprep.subr.mxu0 0.0
    %582 = vmatpush1.msra.mxu0 0.0
    %583 = vmatprep.subr.mxu0 0.0
    %584 = vmatpush1.msra.mxu0 0.0
    %585 = vmatprep.mubr.f32.mxu0 0.0
    %586 = vmatmul.mubr.f32.gmra.mrb[0].mxu0 %v519
    %v587 = vpop.f32.mrb[0].mxu0
    %v588 = vadd.f32 0.0, %v587
    %v589 = vpop.f32.mrb[0].mxu0
    %590 = vdwg.mxu0
    %v591 = vadd.f32 %v515, %v588
    %v592 = vxor.u32 %v591, 2147483648
    %v593 = vmul.f32 %v592, 1.442695
    %v594 = vpow.pop %v593
    %v595 = vadd.f32 %v594, 1.0
    %v596 = vrcp.pop %v595
    %v597 = vmul.f32 1.0, %v596
    %v598 = vadd.f32 %v588, %v287
    %600 = vrot.lane.b32.xlu0 %v598, 64
    %v601 = vpop.permute.xlu0 %600
    %v603 = vmul.f32 %v597, %v601
    %605 = vrot.lane.b32.xlu0 %v603, 64
    %v606 = vpop.permute.xlu0 %605
    %v608 = vadd.f32 %v515, %v606
    %v609 = vtanh.pop %v608
    %v610 = vsub.f32 1.0, %v597
    %612 = vrot.lane.b32.xlu0 %v609, 96
    %v613 = vpop.permute.xlu0 %612
    %v615 = vmul.f32 %v610, %v613
    %v616 = vmul.f32 %v597, %v514
    %v617 = vadd.f32 %v615, %v616
    %v618 = vld [vmem:[#allocation2 + $0x20] sm:$0xff]
    %620 = vrot.lane.b32.xlu0 %v617, 96
    %v621 = vpop.permute.xlu0 %620
    %v622 = vsel %vm204, %v621, 0
    %624 = vmatprep.subr.mxu0 0.0
    %625 = vmatpush1.msra.mxu0 %v195
    %626 = vmatprep.subr.mxu0 0.0
    %627 = vmatpush1.msra.mxu0 %v196
    %628 = vmatprep.subr.mxu0 0.0
    %629 = vmatpush1.msra.mxu0 %v197
    %630 = vmatprep.subr.mxu0 0.0
    %631 = vmatpush1.msra.mxu0 %v198
    %632 = vmatprep.subr.mxu0 0.0
    %633 = vmatpush1.msra.mxu0 0.0
    %634 = vmatprep.subr.mxu0 0.0
    %635 = vmatpush1.msra.mxu0 0.0
    %636 = vmatprep.subr.mxu0 0.0
    %637 = vmatpush1.msra.mxu0 0.0
    %638 = vmatprep.subr.mxu0 0.0
    %639 = vmatpush1.msra.mxu0 0.0
    %640 = vmatprep.subr.mxu0 0.0
    %641 = vmatpush1.msra.mxu0 0.0
    %642 = vmatprep.subr.mxu0 0.0
    %643 = vmatpush1.msra.mxu0 0.0
    %644 = vmatprep.subr.mxu0 0.0
    %645 = vmatpush1.msra.mxu0 0.0
    %646 = vmatprep.subr.mxu0 0.0
    %647 = vmatpush1.msra.mxu0 0.0
    %648 = vmatprep.subr.mxu0 0.0
    %649 = vmatpush1.msra.mxu0 0.0
    %650 = vmatprep.subr.mxu0 0.0
    %651 = vmatpush1.msra.mxu0 0.0
    %652 = vmatprep.subr.mxu0 0.0
    %653 = vmatpush1.msra.mxu0 0.0
    %654 = vmatprep.subr.mxu0 0.0
    %655 = vmatpush1.msra.mxu0 0.0
    %656 = vmatprep.subr.mxu0 0.0
    %657 = vmatpush1.msra.mxu0 0.0
    %658 = vmatprep.subr.mxu0 0.0
    %659 = vmatpush1.msra.mxu0 0.0
    %660 = vmatprep.subr.mxu0 0.0
    %661 = vmatpush1.msra.mxu0 0.0
    %662 = vmatprep.subr.mxu0 0.0
    %663 = vmatpush1.msra.mxu0 0.0
    %664 = vmatprep.subr.mxu0 0.0
    %665 = vmatpush1.msra.mxu0 0.0
    %666 = vmatprep.subr.mxu0 0.0
    %667 = vmatpush1.msra.mxu0 0.0
    %668 = vmatprep.subr.mxu0 0.0
    %669 = vmatpush1.msra.mxu0 0.0
    %670 = vmatprep.subr.mxu0 0.0
    %671 = vmatpush1.msra.mxu0 0.0
    %672 = vmatprep.subr.mxu0 0.0
    %673 = vmatpush1.msra.mxu0 0.0
    %674 = vmatprep.subr.mxu0 0.0
    %675 = vmatpush1.msra.mxu0 0.0
    %676 = vmatprep.subr.mxu0 0.0
    %677 = vmatpush1.msra.mxu0 0.0
    %678 = vmatprep.subr.mxu0 0.0
    %679 = vmatpush1.msra.mxu0 0.0
    %680 = vmatprep.subr.mxu0 0.0
    %681 = vmatpush1.msra.mxu0 0.0
    %682 = vmatprep.subr.mxu0 0.0
    %683 = vmatpush1.msra.mxu0 0.0
    %684 = vmatprep.subr.mxu0 0.0
    %685 = vmatpush1.msra.mxu0 0.0
    %686 = vmatprep.subr.mxu0 0.0
    %687 = vmatpush1.msra.mxu0 0.0
    %688 = vmatprep.mubr.f32.mxu0 0.0
    %689 = vmatmul.mubr.f32.gmra.mrb[0].mxu0 %v622
    %v690 = vpop.f32.mrb[0].mxu0
    %v691 = vadd.f32 0.0, %v690
    %v692 = vpop.f32.mrb[0].mxu0
    %693 = vdwg.mxu0
    %v694 = vadd.f32 %v618, %v691
    %v695 = vxor.u32 %v694, 2147483648
    %v696 = vmul.f32 %v695, 1.442695
    %v697 = vpow.pop %v696
    %v698 = vadd.f32 %v697, 1.0
    %v699 = vrcp.pop %v698
    %v700 = vmul.f32 1.0, %v699
    %v701 = vadd.f32 %v691, %v287
    %703 = vrot.lane.b32.xlu0 %v701, 64
    %v704 = vpop.permute.xlu0 %703
    %v706 = vmul.f32 %v700, %v704
    %708 = vrot.lane.b32.xlu0 %v706, 64
    %v709 = vpop.permute.xlu0 %708
    %v711 = vadd.f32 %v618, %v709
    %v712 = vtanh.pop %v711
    %v713 = vsub.f32 1.0, %v700
    %715 = vrot.lane.b32.xlu0 %v712, 96
    %v716 = vpop.permute.xlu0 %715
    %v718 = vmul.f32 %v713, %v716
    %v719 = vmul.f32 %v700, %v617
    %v720 = vadd.f32 %v718, %v719
    %v721 = vld [vmem:[#allocation2 + $0x28] sm:$0xff]
    %723 = vrot.lane.b32.xlu0 %v720, 96
    %v724 = vpop.permute.xlu0 %723
    %v725 = vsel %vm204, %v724, 0
    %727 = vmatprep.subr.mxu0 0.0
    %728 = vmatpush1.msra.mxu0 %v195
    %729 = vmatprep.subr.mxu0 0.0
    %730 = vmatpush1.msra.mxu0 %v196
    %731 = vmatprep.subr.mxu0 0.0
    %732 = vmatpush1.msra.mxu0 %v197
    %733 = vmatprep.subr.mxu0 0.0
    %734 = vmatpush1.msra.mxu0 %v198
    %735 = vmatprep.subr.mxu0 0.0
    %736 = vmatpush1.msra.mxu0 0.0
    %737 = vmatprep.subr.mxu0 0.0
    %738 = vmatpush1.msra.mxu0 0.0
    %739 = vmatprep.subr.mxu0 0.0
    %740 = vmatpush1.msra.mxu0 0.0
    %741 = vmatprep.subr.mxu0 0.0
    %742 = vmatpush1.msra.mxu0 0.0
    %743 = vmatprep.subr.mxu0 0.0
    %744 = vmatpush1.msra.mxu0 0.0
    %745 = vmatprep.subr.mxu0 0.0
    %746 = vmatpush1.msra.mxu0 0.0
    %747 = vmatprep.subr.mxu0 0.0
    %748 = vmatpush1.msra.mxu0 0.0
    %749 = vmatprep.subr.mxu0 0.0
    %750 = vmatpush1.msra.mxu0 0.0
    %751 = vmatprep.subr.mxu0 0.0
    %752 = vmatpush1.msra.mxu0 0.0
    %753 = vmatprep.subr.mxu0 0.0
    %754 = vmatpush1.msra.mxu0 0.0
    %755 = vmatprep.subr.mxu0 0.0
    %756 = vmatpush1.msra.mxu0 0.0
    %757 = vmatprep.subr.mxu0 0.0
    %758 = vmatpush1.msra.mxu0 0.0
    %759 = vmatprep.subr.mxu0 0.0
    %760 = vmatpush1.msra.mxu0 0.0
    %761 = vmatprep.subr.mxu0 0.0
    %762 = vmatpush1.msra.mxu0 0.0
    %763 = vmatprep.subr.mxu0 0.0
    %764 = vmatpush1.msra.mxu0 0.0
    %765 = vmatprep.subr.mxu0 0.0
    %766 = vmatpush1.msra.mxu0 0.0
    %767 = vmatprep.subr.mxu0 0.0
    %768 = vmatpush1.msra.mxu0 0.0
    %769 = vmatprep.subr.mxu0 0.0
    %770 = vmatpush1.msra.mxu0 0.0
    %771 = vmatprep.subr.mxu0 0.0
    %772 = vmatpush1.msra.mxu0 0.0
    %773 = vmatprep.subr.mxu0 0.0
    %774 = vmatpush1.msra.mxu0 0.0
    %775 = vmatprep.subr.mxu0 0.0
    %776 = vmatpush1.msra.mxu0 0.0
    %777 = vmatprep.subr.mxu0 0.0
    %778 = vmatpush1.msra.mxu0 0.0
    %779 = vmatprep.subr.mxu0 0.0
    %780 = vmatpush1.msra.mxu0 0.0
    %781 = vmatprep.subr.mxu0 0.0
    %782 = vmatpush1.msra.mxu0 0.0
    %783 = vmatprep.subr.mxu0 0.0
    %784 = vmatpush1.msra.mxu0 0.0
    %785 = vmatprep.subr.mxu0 0.0
    %786 = vmatpush1.msra.mxu0 0.0
    %787 = vmatprep.subr.mxu0 0.0
    %788 = vmatpush1.msra.mxu0 0.0
    %789 = vmatprep.subr.mxu0 0.0
    %790 = vmatpush1.msra.mxu0 0.0
    %791 = vmatprep.mubr.f32.mxu0 0.0
    %792 = vmatmul.mubr.f32.gmra.mrb[0].mxu0 %v725
    %v793 = vpop.f32.mrb[0].mxu0
    %v794 = vadd.f32 0.0, %v793
    %v795 = vpop.f32.mrb[0].mxu0
    %796 = vdwg.mxu0
    %v797 = vadd.f32 %v721, %v794
    %v798 = vxor.u32 %v797, 2147483648
    %v799 = vmul.f32 %v798, 1.442695
    %v800 = vpow.pop %v799
    %v801 = vadd.f32 %v800, 1.0
    %v802 = vrcp.pop %v801
    %v803 = vmul.f32 1.0, %v802
    %v804 = vadd.f32 %v794, %v287
    %806 = vrot.lane.b32.xlu0 %v804, 64
    %v807 = vpop.permute.xlu0 %806
    %v809 = vmul.f32 %v803, %v807
    %811 = vrot.lane.b32.xlu0 %v809, 64
    %v812 = vpop.permute.xlu0 %811
    %v814 = vadd.f32 %v721, %v812
    %v815 = vtanh.pop %v814
    %v816 = vsub.f32 1.0, %v803
    %818 = vrot.lane.b32.xlu0 %v815, 96
    %v819 = vpop.permute.xlu0 %818
    %v821 = vmul.f32 %v816, %v819
    %v822 = vmul.f32 %v803, %v720
    %v823 = vadd.f32 %v821, %v822
    %v824 = vld [vmem:[#allocation2 + $0x30] sm:$0xff]
    %826 = vrot.lane.b32.xlu0 %v823, 96
    %v827 = vpop.permute.xlu0 %826
    %v828 = vsel %vm204, %v827, 0
    %830 = vmatprep.subr.mxu0 0.0
    %831 = vmatpush1.msra.mxu0 %v195
    %832 = vmatprep.subr.mxu0 0.0
    %833 = vmatpush1.msra.mxu0 %v196
    %834 = vmatprep.subr.mxu0 0.0
    %835 = vmatpush1.msra.mxu0 %v197
    %836 = vmatprep.subr.mxu0 0.0
    %837 = vmatpush1.msra.mxu0 %v198
    %838 = vmatprep.subr.mxu0 0.0
    %839 = vmatpush1.msra.mxu0 0.0
    %840 = vmatprep.subr.mxu0 0.0
    %841 = vmatpush1.msra.mxu0 0.0
    %842 = vmatprep.subr.mxu0 0.0
    %843 = vmatpush1.msra.mxu0 0.0
    %844 = vmatprep.subr.mxu0 0.0
    %845 = vmatpush1.msra.mxu0 0.0
    %846 = vmatprep.subr.mxu0 0.0
    %847 = vmatpush1.msra.mxu0 0.0
    %848 = vmatprep.subr.mxu0 0.0
    %849 = vmatpush1.msra.mxu0 0.0
    %850 = vmatprep.subr.mxu0 0.0
    %851 = vmatpush1.msra.mxu0 0.0
    %852 = vmatprep.subr.mxu0 0.0
    %853 = vmatpush1.msra.mxu0 0.0
    %854 = vmatprep.subr.mxu0 0.0
    %855 = vmatpush1.msra.mxu0 0.0
    %856 = vmatprep.subr.mxu0 0.0
    %857 = vmatpush1.msra.mxu0 0.0
    %858 = vmatprep.subr.mxu0 0.0
    %859 = vmatpush1.msra.mxu0 0.0
    %860 = vmatprep.subr.mxu0 0.0
    %861 = vmatpush1.msra.mxu0 0.0
    %862 = vmatprep.subr.mxu0 0.0
    %863 = vmatpush1.msra.mxu0 0.0
    %864 = vmatprep.subr.mxu0 0.0
    %865 = vmatpush1.msra.mxu0 0.0
    %866 = vmatprep.subr.mxu0 0.0
    %867 = vmatpush1.msra.mxu0 0.0
    %868 = vmatprep.subr.mxu0 0.0
    %869 = vmatpush1.msra.mxu0 0.0
    %870 = vmatprep.subr.mxu0 0.0
    %871 = vmatpush1.msra.mxu0 0.0
    %872 = vmatprep.subr.mxu0 0.0
    %873 = vmatpush1.msra.mxu0 0.0
    %874 = vmatprep.subr.mxu0 0.0
    %875 = vmatpush1.msra.mxu0 0.0
    %876 = vmatprep.subr.mxu0 0.0
    %877 = vmatpush1.msra.mxu0 0.0
    %878 = vmatprep.subr.mxu0 0.0
    %879 = vmatpush1.msra.mxu0 0.0
    %880 = vmatprep.subr.mxu0 0.0
    %881 = vmatpush1.msra.mxu0 0.0
    %882 = vmatprep.subr.mxu0 0.0
    %883 = vmatpush1.msra.mxu0 0.0
    %884 = vmatprep.subr.mxu0 0.0
    %885 = vmatpush1.msra.mxu0 0.0
    %886 = vmatprep.subr.mxu0 0.0
    %887 = vmatpush1.msra.mxu0 0.0
    %888 = vmatprep.subr.mxu0 0.0
    %889 = vmatpush1.msra.mxu0 0.0
    %890 = vmatprep.subr.mxu0 0.0
    %891 = vmatpush1.msra.mxu0 0.0
    %892 = vmatprep.subr.mxu0 0.0
    %893 = vmatpush1.msra.mxu0 0.0
    %894 = vmatprep.mubr.f32.mxu0 0.0
    %895 = vmatmul.mubr.f32.gmra.mrb[0].mxu0 %v828
    %v896 = vpop.f32.mrb[0].mxu0
    %v897 = vadd.f32 0.0, %v896
    %v898 = vpop.f32.mrb[0].mxu0
    %899 = vdwg.mxu0
    %v900 = vadd.f32 %v824, %v897
    %v901 = vxor.u32 %v900, 2147483648
    %v902 = vmul.f32 %v901, 1.442695
    %v903 = vpow.pop %v902
    %v904 = vadd.f32 %v903, 1.0
    %v905 = vrcp.pop %v904
    %v906 = vmul.f32 1.0, %v905
    %v907 = vadd.f32 %v897, %v287
    %909 = vrot.lane.b32.xlu0 %v907, 64
    %v910 = vpop.permute.xlu0 %909
    %v912 = vmul.f32 %v906, %v910
    %914 = vrot.lane.b32.xlu0 %v912, 64
    %v915 = vpop.permute.xlu0 %914
    %v917 = vadd.f32 %v824, %v915
    %v918 = vtanh.pop %v917
    %v919 = vsub.f32 1.0, %v906
    %921 = vrot.lane.b32.xlu0 %v918, 96
    %v922 = vpop.permute.xlu0 %921
    %v924 = vmul.f32 %v919, %v922
    %v925 = vmul.f32 %v906, %v823
    %v926 = vadd.f32 %v924, %v925
    %v927 = vld [vmem:[#allocation2 + $0x38] sm:$0xff]
    %929 = vrot.lane.b32.xlu0 %v926, 96
    %v930 = vpop.permute.xlu0 %929
    %v931 = vsel %vm204, %v930, 0
    %933 = vmatprep.subr.mxu0 0.0
    %934 = vmatpush1.msra.mxu0 %v195
    %935 = vmatprep.subr.mxu0 0.0
    %936 = vmatpush1.msra.mxu0 %v196
    %937 = vmatprep.subr.mxu0 0.0
    %938 = vmatpush1.msra.mxu0 %v197
    %939 = vmatprep.subr.mxu0 0.0
    %940 = vmatpush1.msra.mxu0 %v198
    %941 = vmatprep.subr.mxu0 0.0
    %942 = vmatpush1.msra.mxu0 0.0
    %943 = vmatprep.subr.mxu0 0.0
    %944 = vmatpush1.msra.mxu0 0.0
    %945 = vmatprep.subr.mxu0 0.0
    %946 = vmatpush1.msra.mxu0 0.0
    %947 = vmatprep.subr.mxu0 0.0
    %948 = vmatpush1.msra.mxu0 0.0
    %949 = vmatprep.subr.mxu0 0.0
    %950 = vmatpush1.msra.mxu0 0.0
    %951 = vmatprep.subr.mxu0 0.0
    %952 = vmatpush1.msra.mxu0 0.0
    %953 = vmatprep.subr.mxu0 0.0
    %954 = vmatpush1.msra.mxu0 0.0
    %955 = vmatprep.subr.mxu0 0.0
    %956 = vmatpush1.msra.mxu0 0.0
    %957 = vmatprep.subr.mxu0 0.0
    %958 = vmatpush1.msra.mxu0 0.0
    %959 = vmatprep.subr.mxu0 0.0
    %960 = vmatpush1.msra.mxu0 0.0
    %961 = vmatprep.subr.mxu0 0.0
    %962 = vmatpush1.msra.mxu0 0.0
    %963 = vmatprep.subr.mxu0 0.0
    %964 = vmatpush1.msra.mxu0 0.0
    %965 = vmatprep.subr.mxu0 0.0
    %966 = vmatpush1.msra.mxu0 0.0
    %967 = vmatprep.subr.mxu0 0.0
    %968 = vmatpush1.msra.mxu0 0.0
    %969 = vmatprep.subr.mxu0 0.0
    %970 = vmatpush1.msra.mxu0 0.0
    %971 = vmatprep.subr.mxu0 0.0
    %972 = vmatpush1.msra.mxu0 0.0
    %973 = vmatprep.subr.mxu0 0.0
    %974 = vmatpush1.msra.mxu0 0.0
    %975 = vmatprep.subr.mxu0 0.0
    %976 = vmatpush1.msra.mxu0 0.0
    %977 = vmatprep.subr.mxu0 0.0
    %978 = vmatpush1.msra.mxu0 0.0
    %979 = vmatprep.subr.mxu0 0.0
    %980 = vmatpush1.msra.mxu0 0.0
    %981 = vmatprep.subr.mxu0 0.0
    %982 = vmatpush1.msra.mxu0 0.0
    %983 = vmatprep.subr.mxu0 0.0
    %984 = vmatpush1.msra.mxu0 0.0
    %985 = vmatprep.subr.mxu0 0.0
    %986 = vmatpush1.msra.mxu0 0.0
    %987 = vmatprep.subr.mxu0 0.0
    %988 = vmatpush1.msra.mxu0 0.0
    %989 = vmatprep.subr.mxu0 0.0
    %990 = vmatpush1.msra.mxu0 0.0
    %991 = vmatprep.subr.mxu0 0.0
    %992 = vmatpush1.msra.mxu0 0.0
    %993 = vmatprep.subr.mxu0 0.0
    %994 = vmatpush1.msra.mxu0 0.0
    %995 = vmatprep.subr.mxu0 0.0
    %996 = vmatpush1.msra.mxu0 0.0
    %997 = vmatprep.mubr.f32.mxu0 0.0
    %998 = vmatmul.mubr.f32.gmra.mrb[0].mxu0 %v931
    %v999 = vpop.f32.mrb[0].mxu0
    %v1000 = vadd.f32 0.0, %v999
    %v1001 = vpop.f32.mrb[0].mxu0
    %1002 = vdwg.mxu0
    %v1003 = vadd.f32 %v927, %v1000
    %v1004 = vxor.u32 %v1003, 2147483648
    %v1005 = vmul.f32 %v1004, 1.442695
    %v1006 = vpow.pop %v1005
    %v1007 = vadd.f32 %v1006, 1.0
    %v1008 = vrcp.pop %v1007
    %v1009 = vmul.f32 1.0, %v1008
    %v1010 = vadd.f32 %v1000, %v287
    %1012 = vrot.lane.b32.xlu0 %v1010, 64
    %v1013 = vpop.permute.xlu0 %1012
    %v1015 = vmul.f32 %v1009, %v1013
    %1017 = vrot.lane.b32.xlu0 %v1015, 64
    %v1018 = vpop.permute.xlu0 %1017
    %v1020 = vadd.f32 %v927, %v1018
    %v1021 = vtanh.pop %v1020
    %v1022 = vsub.f32 1.0, %v1009
    %1024 = vrot.lane.b32.xlu0 %v1021, 96
    %v1025 = vpop.permute.xlu0 %1024
    %v1027 = vmul.f32 %v1022, %v1025
    %v1028 = vmul.f32 %v1009, %v926
    %v1029 = vadd.f32 %v1027, %v1028
    %1031 = vrot.lane.b32.xlu0 %v1029, 96
    %v1032 = vpop.permute.xlu0 %1031
    %v1034 = vsel %vm204, %v1032, 0.0
    %1035 = vadd.xlane.f32.xlu0 %v1034
    %v1036 = vpop.xlane.xlu0 %1035
    %v1037 = vrcp.pop 32.0
    %v1038 = vmul.f32 %v1036, %v1037
    %v1039 = vsub.f32 %v1029, %v1038
    %v1040 = vmul.f32 %v1039, %v1039
    %1042 = vrot.lane.b32.xlu0 %v1040, 96
    %v1043 = vpop.permute.xlu0 %1042
    %v1045 = vsel %vm204, %v1043, 0.0
    %1046 = vadd.xlane.f32.xlu0 %v1045
    %v1047 = vpop.xlane.xlu0 %1046
    %v1048 = vmul.f32 %v1047, %v1037
    %v1049 = vadd.f32 %v1048, 1e-05
    %v1050 = vrsqrt.pop %v1049
    %v1051 = vmul.f32 %v1039, %v1050
    %v1052 = vlaneseq
    %v1053 = vshrl.u32 %v1052, 7
    %v1054 = vsub.s32 0, %v1053
    %v1055 = vrot.slane %v39, %v1054
    %1057 = vrot.lane.b32.xlu0 %v1055, 32
    %v1058 = vpop.permute.xlu0 %1057
    %v1060 = vmul.f32 %v1051, %v1058
    %v1061 = vlaneseq
    %v1062 = vshrl.u32 %v1061, 7
    %v1063 = vsub.s32 0, %v1062
    %v1064 = vrot.slane %v40, %v1063
    %1066 = vrot.lane.b32.xlu0 %v1064, 32
    %v1067 = vpop.permute.xlu0 %1066
    %v1069 = vadd.f32 %v1060, %v1067
    %v1070 = vmax.f32 %v1069, 0.0
    %v1071 = vld [vmem:[%s4] sm:$0xff]
    %v1072 = vld [vmem:[%s4 + $0x8] sm:$0xff]
    %v1073 = vld [vmem:[%s4 + $0x10] sm:$0xff]
    %v1074 = vld [vmem:[%s4 + $0x18] sm:$0xff]
    %v1075 = vlaneseq
    %v1076 = vshrl.u32 %v1075, 7
    %v1077 = vsub.s32 0, %v1076
    %v1078 = vrot.slane %v41, %v1077
    %1080 = vrot.lane.b32.xlu0 %v1070, 96
    %v1081 = vpop.permute.xlu0 %1080
    %v1082 = vsel %vm204, %v1081, 0
    %1084 = vmatprep.subr.mxu0 0.0
    %1085 = vmatpush1.msra.mxu0 %v1071
    %1086 = vmatprep.subr.mxu0 0.0
    %1087 = vmatpush1.msra.mxu0 %v1072
    %1088 = vmatprep.subr.mxu0 0.0
    %1089 = vmatpush1.msra.mxu0 %v1073
    %1090 = vmatprep.subr.mxu0 0.0
    %1091 = vmatpush1.msra.mxu0 %v1074
    %1092 = vmatprep.subr.mxu0 0.0
    %1093 = vmatpush1.msra.mxu0 0.0
    %1094 = vmatprep.subr.mxu0 0.0
    %1095 = vmatpush1.msra.mxu0 0.0
    %1096 = vmatprep.subr.mxu0 0.0
    %1097 = vmatpush1.msra.mxu0 0.0
    %1098 = vmatprep.subr.mxu0 0.0
    %1099 = vmatpush1.msra.mxu0 0.0
    %1100 = vmatprep.subr.mxu0 0.0
    %1101 = vmatpush1.msra.mxu0 0.0
    %1102 = vmatprep.subr.mxu0 0.0
    %1103 = vmatpush1.msra.mxu0 0.0
    %1104 = vmatprep.subr.mxu0 0.0
    %1105 = vmatpush1.msra.mxu0 0.0
    %1106 = vmatprep.subr.mxu0 0.0
    %1107 = vmatpush1.msra.mxu0 0.0
    %1108 = vmatprep.subr.mxu0 0.0
    %1109 = vmatpush1.msra.mxu0 0.0
    %1110 = vmatprep.subr.mxu0 0.0
    %1111 = vmatpush1.msra.mxu0 0.0
    %1112 = vmatprep.subr.mxu0 0.0
    %1113 = vmatpush1.msra.mxu0 0.0
    %1114 = vmatprep.subr.mxu0 0.0
    %1115 = vmatpush1.msra.mxu0 0.0
    %1116 = vmatprep.subr.mxu0 0.0
    %1117 = vmatpush1.msra.mxu0 0.0
    %1118 = vmatprep.subr.mxu0 0.0
    %1119 = vmatpush1.msra.mxu0 0.0
    %1120 = vmatprep.subr.mxu0 0.0
    %1121 = vmatpush1.msra.mxu0 0.0
    %1122 = vmatprep.subr.mxu0 0.0
    %1123 = vmatpush1.msra.mxu0 0.0
    %1124 = vmatprep.subr.mxu0 0.0
    %1125 = vmatpush1.msra.mxu0 0.0
    %1126 = vmatprep.subr.mxu0 0.0
    %1127 = vmatpush1.msra.mxu0 0.0
    %1128 = vmatprep.subr.mxu0 0.0
    %1129 = vmatpush1.msra.mxu0 0.0
    %1130 = vmatprep.subr.mxu0 0.0
    %1131 = vmatpush1.msra.mxu0 0.0
    %1132 = vmatprep.subr.mxu0 0.0
    %1133 = vmatpush1.msra.mxu0 0.0
    %1134 = vmatprep.subr.mxu0 0.0
    %1135 = vmatpush1.msra.mxu0 0.0
    %1136 = vmatprep.subr.mxu0 0.0
    %1137 = vmatpush1.msra.mxu0 0.0
    %1138 = vmatprep.subr.mxu0 0.0
    %1139 = vmatpush1.msra.mxu0 0.0
    %1140 = vmatprep.subr.mxu0 0.0
    %1141 = vmatpush1.msra.mxu0 0.0
    %1142 = vmatprep.subr.mxu0 0.0
    %1143 = vmatpush1.msra.mxu0 0.0
    %1144 = vmatprep.subr.mxu0 0.0
    %1145 = vmatpush1.msra.mxu0 0.0
    %1146 = vmatprep.subr.mxu0 0.0
    %1147 = vmatpush1.msra.mxu0 0.0
    %1148 = vmatprep.mubr.f32.mxu0 0.0
    %1149 = vmatmul.mubr.f32.gmra.mrb[0].mxu0 %v1082
    %v1150 = vpop.f32.mrb[0].mxu0
    %v1151 = vadd.f32 %v1078, %v1150
    %v1152 = vpop.f32.mrb[0].mxu0
    %1153 = vdwg.mxu0
    %1155 = vrot.lane.b32.xlu0 %v1151, 32
    %v1156 = vpop.permute.xlu0 %1155
    %v1158 = vadd.f32 %v1029, %v1156
    %v1159 = vld [vmem:[%s5] sm:$0xff]
    %v1160 = vld [vmem:[%s5 + $0x8] sm:$0xff]
    %v1161 = vld [vmem:[%s5 + $0x10] sm:$0xff]
    %v1162 = vld [vmem:[%s5 + $0x18] sm:$0xff]
    %v1163 = vld [vmem:[%s5 + $0x20] sm:$0x1]
    %v1164 = vlaneseq
    %v1165 = vshrl.u32 %v1164, 7
    %v1166 = vsub.s32 0, %v1165
    %v1167 = vrot.slane %v1163, %v1166
    %1169 = vrot.lane.b32.xlu0 %v1158, 96
    %v1170 = vpop.permute.xlu0 %1169
    %v1171 = vsel %vm204, %v1170, 0
    %1173 = vmatprep.subr.mxu0 0.0
    %1174 = vmatpush1.msra.mxu0 %v1159
    %1175 = vmatprep.subr.mxu0 0.0
    %1176 = vmatpush1.msra.mxu0 %v1160
    %1177 = vmatprep.subr.mxu0 0.0
    %1178 = vmatpush1.msra.mxu0 %v1161
    %1179 = vmatprep.subr.mxu0 0.0
    %1180 = vmatpush1.msra.mxu0 %v1162
    %1181 = vmatprep.subr.mxu0 0.0
    %1182 = vmatpush1.msra.mxu0 0.0
    %1183 = vmatprep.subr.mxu0 0.0
    %1184 = vmatpush1.msra.mxu0 0.0
    %1185 = vmatprep.subr.mxu0 0.0
    %1186 = vmatpush1.msra.mxu0 0.0
    %1187 = vmatprep.subr.mxu0 0.0
    %1188 = vmatpush1.msra.mxu0 0.0
    %1189 = vmatprep.subr.mxu0 0.0
    %1190 = vmatpush1.msra.mxu0 0.0
    %1191 = vmatprep.subr.mxu0 0.0
    %1192 = vmatpush1.msra.mxu0 0.0
    %1193 = vmatprep.subr.mxu0 0.0
    %1194 = vmatpush1.msra.mxu0 0.0
    %1195 = vmatprep.subr.mxu0 0.0
    %1196 = vmatpush1.msra.mxu0 0.0
    %1197 = vmatprep.subr.mxu0 0.0
    %1198 = vmatpush1.msra.mxu0 0.0
    %1199 = vmatprep.subr.mxu0 0.0
    %1200 = vmatpush1.msra.mxu0 0.0
    %1201 = vmatprep.subr.mxu0 0.0
    %1202 = vmatpush1.msra.mxu0 0.0
    %1203 = vmatprep.subr.mxu0 0.0
    %1204 = vmatpush1.msra.mxu0 0.0
    %1205 = vmatprep.subr.mxu0 0.0
    %1206 = vmatpush1.msra.mxu0 0.0
    %1207 = vmatprep.subr.mxu0 0.0
    %1208 = vmatpush1.msra.mxu0 0.0
    %1209 = vmatprep.subr.mxu0 0.0
    %1210 = vmatpush1.msra.mxu0 0.0
    %1211 = vmatprep.subr.mxu0 0.0
    %1212 = vmatpush1.msra.mxu0 0.0
    %1213 = vmatprep.subr.mxu0 0.0
    %1214 = vmatpush1.msra.mxu0 0.0
    %1215 = vmatprep.subr.mxu0 0.0
    %1216 = vmatpush1.msra.mxu0 0.0
    %1217 = vmatprep.subr.mxu0 0.0
    %1218 = vmatpush1.msra.mxu0 0.0
    %1219 = vmatprep.subr.mxu0 0.0
    %1220 = vmatpush1.msra.mxu0 0.0
    %1221 = vmatprep.subr.mxu0 0.0
    %1222 = vmatpush1.msra.mxu0 0.0
    %1223 = vmatprep.subr.mxu0 0.0
    %1224 = vmatpush1.msra.mxu0 0.0
    %1225 = vmatprep.subr.mxu0 0.0
    %1226 = vmatpush1.msra.mxu0 0.0
    %1227 = vmatprep.subr.mxu0 0.0
    %1228 = vmatpush1.msra.mxu0 0.0
    %1229 = vmatprep.subr.mxu0 0.0
    %1230 = vmatpush1.msra.mxu0 0.0
    %1231 = vmatprep.subr.mxu0 0.0
    %1232 = vmatpush1.msra.mxu0 0.0
    %1233 = vmatprep.subr.mxu0 0.0
    %1234 = vmatpush1.msra.mxu0 0.0
    %1235 = vmatprep.subr.mxu0 0.0
    %1236 = vmatpush1.msra.mxu0 0.0
    %1237 = vmatprep.mubr.f32.mxu0 0.0
    %1238 = vmatmul.mubr.f32.gmra.mrb[0].mxu0 %v1171
    %v1239 = vpop.f32.mrb[0].mxu0
    %v1240 = vadd.f32 %v1167, %v1239
    %v1241 = vpop.f32.mrb[0].mxu0
    %1242 = vdwg.mxu0
    %v1243 = vxor.u32 %v1240, 2147483648
    %v1244 = vmul.f32 %v1243, 1.442695
    %v1245 = vpow.pop %v1244
    %v1246 = vadd.f32 %v1245, 1.0
    %v1247 = vrcp.pop %v1246
    %v1248 = vmul.f32 1.0, %v1247
    %1249 = vst [vmem:[%s6] sm:$0xff] %v1248
    // Predicated region
    $region30: #{_forward.1} parent=1 // pred_check
      _
    $region31: #{_forward.1} parent=1 // pred_check_branch
      %1251 = sbr.rel (0) target = $region33
    $region32: #{_forward.1} parent=1 // pred_region
      _
    $region33: #{_forward.1} parent=1 // pred_fallthru
      _
    // Predicated region
    $region34: #{_forward.1} parent=1 // pred_check
      _
    $region35: #{_forward.1} parent=1 // pred_check_branch
      %1253 = sbr.rel (0) target = $region37
    $region36: #{_forward.1} parent=1 // pred_region
      _
    $region37: #{_forward.1} parent=1 // pred_fallthru
      _
    %1254 = vsyncpa [#allocation4], 1

</llo_original>
